<compile_context>
chip_gen: v5e
topology: v5e:2x2
jax: 0.10.0
libtpu: 0.0.40
codegen_flags: <defaults>
</compile_context>

<pallas_src>
import functools

import jax
import jax.numpy as jnp
from jax.experimental import pallas as pl
from jax.experimental.pallas import tpu as pltpu

LANE = 128
SUBLANE = 8


def _round_up(x, m):
    return (x + m - 1) // m * m


def _default_tile_and_vmem():
    """Chip-dependent batch-tile / scoped-VMEM defaults (trace-time Python)."""
    try:
        kind = jax.devices()[0].device_kind.lower()
    except Exception:  # pragma: no cover - defensive
        kind = ""
    if "v5" in kind or "v6" in kind:          # 128 MiB VMEM parts
        return 4096, 96 * 1024 * 1024
    # v7x (64 MiB VMEM per TensorCore) and anything unknown: stay conservative.
    return 2048, 48 * 1024 * 1024


# ----------------------------- Pallas kernel -------------------------------
def tiny_fused_kernel(x_ref, wb_ref, w1_ref, b1_ref, w2_ref, b2_ref, o_ref):
    """Fused forward for one batch tile.

    emb = x @ Wb                       (stacked backbone projection == hstack)
    h   = relu(emb @ W1 + b1)          (dropout in eval mode == identity)
    out = h @ W2 + b2                  (class dim pre-padded to lane multiple)

    All matmuls: bf16 operands, f32 accumulation on the MXU.
    bf16 casts / bias add / ReLU run on the VPU under MXU slack.
    """
    x = x_ref[...].astype(jnp.bfloat16)                     # in-VMEM cast
    emb = jnp.dot(x, wb_ref[...], preferred_element_type=jnp.float32)
    h = jnp.dot(emb.astype(jnp.bfloat16), w1_ref[...],
                preferred_element_type=jnp.float32)
    h = jnp.maximum(h + b1_ref[...], 0.0)
    out = jnp.dot(h.astype(jnp.bfloat16), w2_ref[...],
                  preferred_element_type=jnp.float32)
    o_ref[...] = (out + b2_ref[...]).astype(o_ref.dtype)


# ------------------------------- wrapper ------------------------------------
@functools.partial(jax.jit,
                   static_argnames=("num_classes", "tm", "vmem_limit_bytes"))
def tiny_model_forward(x_nchw, wb, w1, b1_2d, w2_pad, b2_2d_pad, *,
                       num_classes, tm=None, vmem_limit_bytes=None):
    """Run the fully fused TinyModel forward in one pallas_call."""
    if tm is None or vmem_limit_bytes is None:
        d_tm, d_vmem = _default_tile_and_vmem()
        tm = d_tm if tm is None else tm
        vmem_limit_bytes = d_vmem if vmem_limit_bytes is None else vmem_limit_bytes

    B = x_nchw.shape[0]
    x_flat = x_nchw.reshape(B, -1)        # stays f32; cast happens in-kernel

    IN = x_flat.shape[1]                  # flattened backbone input
    F = wb.shape[1]                       # sum(emb_dims)
    H = w1.shape[1]                       # 512
    CP = w2_pad.shape[1]                  # num_classes padded to mult of 128

    # Batch tiling without any jnp.pad:
    #  * B <= tm : one block whose sublane dim equals the full batch dim
    #    (always a legal block shape, exact cover, no masking).
    #  * B  > tm : sublane-aligned tile; a ragged last block is handled by
    #    Pallas' masked writes (garbage rows are never written to HBM).
    tm_eff = B if B <= tm else _round_up(tm, SUBLANE)
    grid_m = pl.cdiv(B, tm_eff)

    flops = 2 * B * (IN * F + F * H + H * CP)
    bytes_accessed = (
        x_flat.size * 4 + wb.size * 2 + w1.size * 2 + w2_pad.size * 2
        + b1_2d.size * 4 + b2_2d_pad.size * 4 + B * CP * 4
    )

    out = pl.pallas_call(
        tiny_fused_kernel,
        out_shape=jax.ShapeDtypeStruct((B, CP), jnp.float32),
        grid=(grid_m,),
        in_specs=[
            pl.BlockSpec((tm_eff, IN), lambda i: (i, 0)),   # x tile (pipelined)
            pl.BlockSpec((IN, F), lambda i: (0, 0)),        # stacked backbone W
            pl.BlockSpec((F, H), lambda i: (0, 0)),         # W1 [in, out]
            pl.BlockSpec((1, H), lambda i: (0, 0)),         # b1 (f32)
            pl.BlockSpec((H, CP), lambda i: (0, 0)),        # W2 [in, out] padded
            pl.BlockSpec((1, CP), lambda i: (0, 0)),        # b2 padded (f32)
        ],
        out_specs=pl.BlockSpec((tm_eff, CP), lambda i: (i, 0)),
        compiler_params=pltpu.CompilerParams(
            dimension_semantics=("parallel",),              # v7x: 2 TCs split B
            vmem_limit_bytes=vmem_limit_bytes,
        ),
        cost_estimate=pl.CostEstimate(
            flops=flops, transcendentals=0, bytes_accessed=bytes_accessed),
    )(x_flat, wb, w1, b1_2d, w2_pad, b2_2d_pad)

    # Only the class dim needs slicing (lane padding); rows are exact.
    return out[:, :num_classes]


# ------------------------------- params -------------------------------------
def make_params(key, in_flat, emb_dims, hidden, num_classes):
    """Deterministic init. All layout work (transpose / concat / pad / cast)
    is done ONCE here, not in the forward path."""
    ks = jax.random.split(key, len(emb_dims) + 4)

    # Synthetic backbone projections (stand-ins for the external
    # model_dictionary models), already [in_flat, d] so x_flat @ Wb works
    # without transpose.
    backbones = [
        jax.random.normal(ks[i], (in_flat, d), jnp.float32) * 0.02
        for i, d in enumerate(emb_dims)
    ]
    input_size = sum(emb_dims)

    # torch.nn.Linear weights, stored pre-transposed to [in, out].
    w1 = jax.random.normal(ks[-4], (input_size, hidden), jnp.float32) * 0.02
    b1 = jax.random.normal(ks[-3], (hidden,), jnp.float32) * 0.01
    w2 = jax.random.normal(ks[-2], (hidden, num_classes), jnp.float32) * 0.02
    b2 = jax.random.normal(ks[-1], (num_classes,), jnp.float32) * 0.01

    # hstack(x @ Wb_i) == x @ concat(Wb_i, axis=1): fold backbones + concat.
    wb_cat = jnp.concatenate(backbones, axis=1)

    # Lane-dense output: zero-pad the class dim to a multiple of 128.
    cp = _round_up(num_classes, LANE)
    w2_pad = jnp.pad(w2, ((0, 0), (0, cp - num_classes)))
    b2_pad = jnp.pad(b2, (0, cp - num_classes))

    kernel_params = dict(
        wb=wb_cat.astype(jnp.bfloat16),
        w1=w1.astype(jnp.bfloat16),
        b1_2d=b1.reshape(1, hidden).astype(jnp.float32),
        w2_pad=w2_pad.astype(jnp.bfloat16),
        b2_2d_pad=b2_pad.reshape(1, cp).astype(jnp.float32),
    )
    ref_params = dict(backbones=backbones, w1=w1, b1=b1, w2=w2, b2=b2)
    return kernel_params, ref_params


# --------------------------------- main --------------------------------------
if __name__ == "__main__":
    key = jax.random.PRNGKey(0)
    kx, kp = jax.random.split(key)

    # Small shapes: two joined backbones, 128-dim embeddings each.
    B, C_in, Hs, Ws = 2, 4, 16, 16
    emb_dims = (128, 128)            # model_to_embedding_dictionary values
    hidden = 512                     # linear1 out
    num_classes = 16                 # total_classes

    x = jax.random.normal(kx, (B, C_in, Hs, Ws), jnp.float32)  # NCHW
    kparams, refp = make_params(kp, C_in * Hs * Ws, emb_dims, hidden, num_classes)

    out = tiny_model_forward(
        x, kparams["wb"], kparams["w1"], kparams["b1_2d"],
        kparams["w2_pad"], kparams["b2_2d_pad"], num_classes=num_classes)
    out = jax.block_until_ready(out)

    # Pure-JAX f32 reference of the full forward (backbones + hstack + MLP).
    x_flat = x.reshape(B, -1)
    emb = jnp.concatenate([x_flat @ wb for wb in refp["backbones"]], axis=1)
    h = jnp.maximum(emb @ refp["w1"] + refp["b1"], 0.0)
    ref = h @ refp["w2"] + refp["b2"]

    assert out.shape == (B, num_classes)
    # bf16 MXU operands (f32 accumulate) -> relaxed tolerance vs f32 reference.
    assert jnp.allclose(out, ref, atol=5e-2, rtol=5e-2), (
        float(jnp.max(jnp.abs(out - ref))))

    print("KERNEL_OK")
</pallas_src>

<mosaic_0001>
module attributes {stable_mosaic.version = 11 : i64} {
  func.func @tiny_fused_kernel(%arg0: i32, %arg1: memref<2x1024xf32, #tpu.memory_space<vmem>>, %arg2: memref<1024x256xbf16, #tpu.memory_space<vmem>>, %arg3: memref<256x512xbf16, #tpu.memory_space<vmem>>, %arg4: memref<1x512xf32, #tpu.memory_space<vmem>>, %arg5: memref<512x128xbf16, #tpu.memory_space<vmem>>, %arg6: memref<1x128xf32, #tpu.memory_space<vmem>>, %arg7: memref<2x128xf32, #tpu.memory_space<vmem>>) attributes {dimension_semantics = [#tpu.dimension_semantics<parallel>], iteration_bounds = array<i64: 1>, scalar_prefetch = 0 : i64, scratch_operands = 0 : i64, tpu.core_type = #tpu.core_type<tc>, window_params = [{transform_indices = @transform_0, window_bounds = array<i64: 2, 1024>}, {pipeline_mode = #tpu.pipeline_mode<synchronous>, transform_indices = @transform_1, window_bounds = array<i64: 1024, 256>}, {pipeline_mode = #tpu.pipeline_mode<synchronous>, transform_indices = @transform_2, window_bounds = array<i64: 256, 512>}, {pipeline_mode = #tpu.pipeline_mode<synchronous>, transform_indices = @transform_3, window_bounds = array<i64: 1, 512>}, {pipeline_mode = #tpu.pipeline_mode<synchronous>, transform_indices = @transform_4, window_bounds = array<i64: 512, 128>}, {pipeline_mode = #tpu.pipeline_mode<synchronous>, transform_indices = @transform_5, window_bounds = array<i64: 1, 128>}, {transform_indices = @transform_6, window_bounds = array<i64: 2, 128>}]} {
    %c0 = arith.constant 0 : index
    %c0_0 = arith.constant 0 : index
    %0 = vector.load %arg1[%c0, %c0_0] : memref<2x1024xf32, #tpu.memory_space<vmem>>, vector<2x1024xf32>
    %1 = arith.truncf %0 : vector<2x1024xf32> to vector<2x1024xbf16>
    %c0_1 = arith.constant 0 : index
    %c0_2 = arith.constant 0 : index
    %2 = vector.load %arg2[%c0_1, %c0_2] : memref<1024x256xbf16, #tpu.memory_space<vmem>>, vector<1024x256xbf16>
    %cst = arith.constant dense<0.000000e+00> : vector<2x256xf32>
    %3 = tpu.matmul %1, %2, %cst {dimension_numbers = #tpu.dot_dimension_numbers<[1], [0], [0], [1], [0, 0, 1, 1], [], []>} : vector<2x1024xbf16>, vector<1024x256xbf16>, vector<2x256xf32> -> vector<2x256xf32>
    %4 = arith.truncf %3 : vector<2x256xf32> to vector<2x256xbf16>
    %c0_3 = arith.constant 0 : index
    %c0_4 = arith.constant 0 : index
    %5 = vector.load %arg3[%c0_3, %c0_4] : memref<256x512xbf16, #tpu.memory_space<vmem>>, vector<256x512xbf16>
    %cst_5 = arith.constant dense<0.000000e+00> : vector<2x512xf32>
    %6 = tpu.matmul %4, %5, %cst_5 {dimension_numbers = #tpu.dot_dimension_numbers<[1], [0], [0], [1], [0, 0, 1, 1], [], []>} : vector<2x256xbf16>, vector<256x512xbf16>, vector<2x512xf32> -> vector<2x512xf32>
    %c0_6 = arith.constant 0 : index
    %c0_7 = arith.constant 0 : index
    %7 = vector.load %arg4[%c0_6, %c0_7] : memref<1x512xf32, #tpu.memory_space<vmem>>, vector<1x512xf32>
    %8 = vector.broadcast %7 : vector<1x512xf32> to vector<2x512xf32>
    %9 = arith.addf %6, %8 : vector<2x512xf32>
    %cst_8 = arith.constant 0.000000e+00 : f32
    %10 = vector.broadcast %cst_8 : f32 to vector<2x512xf32>
    %11 = arith.maximumf %9, %10 : vector<2x512xf32>
    %12 = arith.truncf %11 : vector<2x512xf32> to vector<2x512xbf16>
    %c0_9 = arith.constant 0 : index
    %c0_10 = arith.constant 0 : index
    %13 = vector.load %arg5[%c0_9, %c0_10] : memref<512x128xbf16, #tpu.memory_space<vmem>>, vector<512x128xbf16>
    %cst_11 = arith.constant dense<0.000000e+00> : vector<2x128xf32>
    %14 = tpu.matmul %12, %13, %cst_11 {dimension_numbers = #tpu.dot_dimension_numbers<[1], [0], [0], [1], [0, 0, 1, 1], [], []>} : vector<2x512xbf16>, vector<512x128xbf16>, vector<2x128xf32> -> vector<2x128xf32>
    %c0_12 = arith.constant 0 : index
    %c0_13 = arith.constant 0 : index
    %15 = vector.load %arg6[%c0_12, %c0_13] : memref<1x128xf32, #tpu.memory_space<vmem>>, vector<1x128xf32>
    %16 = vector.broadcast %15 : vector<1x128xf32> to vector<2x128xf32>
    %17 = arith.addf %14, %16 : vector<2x128xf32>
    %c0_14 = arith.constant 0 : index
    %c0_15 = arith.constant 0 : index
    %18 = vector.load %arg7[%c0_14, %c0_15] : memref<2x128xf32, #tpu.memory_space<vmem>>, vector<2x128xf32>
    tpu.vector_store %arg7[%c0_14, %c0_15], %17 {strides = array<i32>} : memref<2x128xf32, #tpu.memory_space<vmem>>, vector<2x128xf32>,
    return
  }
  func.func @transform_0(%arg0: i32) -> (i32, i32) {
    %c0_i32 = arith.constant 0 : i32
    %c0_i32_0 = arith.constant 0 : i32
    return %arg0, %c0_i32 : i32, i32
  }
  func.func @transform_1(%arg0: i32) -> (i32, i32) {
    %c0_i32 = arith.constant 0 : i32
    %c0_i32_0 = arith.constant 0 : i32
    %c0_i32_1 = arith.constant 0 : i32
    return %c0_i32, %c0_i32_0 : i32, i32
  }
  func.func @transform_2(%arg0: i32) -> (i32, i32) {
    %c0_i32 = arith.constant 0 : i32
    %c0_i32_0 = arith.constant 0 : i32
    %c0_i32_1 = arith.constant 0 : i32
    return %c0_i32, %c0_i32_0 : i32, i32
  }
  func.func @transform_3(%arg0: i32) -> (i32, i32) {
    %c0_i32 = arith.constant 0 : i32
    %c0_i32_0 = arith.constant 0 : i32
    %c0_i32_1 = arith.constant 0 : i32
    return %c0_i32, %c0_i32_0 : i32, i32
  }
  func.func @transform_4(%arg0: i32) -> (i32, i32) {
    %c0_i32 = arith.constant 0 : i32
    %c0_i32_0 = arith.constant 0 : i32
    %c0_i32_1 = arith.constant 0 : i32
    return %c0_i32, %c0_i32_0 : i32, i32
  }
  func.func @transform_5(%arg0: i32) -> (i32, i32) {
    %c0_i32 = arith.constant 0 : i32
    %c0_i32_0 = arith.constant 0 : i32
    %c0_i32_1 = arith.constant 0 : i32
    return %c0_i32, %c0_i32_0 : i32, i32
  }
  func.func @transform_6(%arg0: i32) -> (i32, i32) {
    %c0_i32 = arith.constant 0 : i32
    %c0_i32_0 = arith.constant 0 : i32
    return %arg0, %c0_i32 : i32, i32
  }
}

</mosaic_0001>

<llo_original>
// kernel: tiny_model_forward.1
$region0: #{tiny_model_forward.1}
  #allocation0 [shape = 'u32[]', space=smem, size = 0x4, offset = 0x4, fixed_abs, tag = 'smem constant byte address 0x4 - core index']
  #allocation1 [shape = 'u32[72,128]{1,0:T(1,128)}', space=vmem, size = 0x9000, scoped, tag = 'internal scratch']
  %s0 = inlined_call_operand.vmem [shape: f32[2,1024], index: 0, kind: input, shape index: {}]
  %s1 = inlined_call_operand.hbm [shape: bf16[1024,256], index: 1, kind: input, shape index: {}]
  %s2 = inlined_call_operand.hbm [shape: bf16[256,512], index: 2, kind: input, shape index: {}]
  %s3 = inlined_call_operand.vmem [shape: f32[1,512], index: 3, kind: input, shape index: {}]
  %s4 = inlined_call_operand.hbm [shape: bf16[512,128], index: 4, kind: input, shape index: {}]
  %s5 = inlined_call_operand.vmem [shape: f32[1,128], index: 5, kind: input, shape index: {}]
  %s6 = inlined_call_operand.hbm [shape: f32[2,128], index: 6, kind: output, shape index: {}]
  %s7 = sld [smem:[#allocation0]]
  $region46: #{tiny_model_forward.1} parent=0
    _
  %s9 = ssub.s32 1, %s7
  %s10 = scalar_select 0, %s9, %s7
  $region1: #{tiny_model_forward.1} parent=0
    #allocation2 [shape = 'u8[524288]{0}', space=vmem, size = 0x80000, scoped, tag = 'input window, operand 1, single buffered']
    #allocation3 [shape = 's32[1]{0}', space=sflag, size = 0x4, scoped, tag = 'scoped memory for tiny_model_forward.1']
    #allocation4 [shape = 's32[1]{0}', space=sflag, size = 0x4, scoped, tag = 'scoped memory for tiny_model_forward.1']
    #allocation5 [shape = 'u8[262144]{0}', space=vmem, size = 0x40000, scoped, tag = 'input window, operand 2, single buffered']
    #allocation6 [shape = 's32[1]{0}', space=sflag, size = 0x4, scoped, tag = 'scoped memory for tiny_model_forward.1']
    #allocation7 [shape = 'u8[131072]{0}', space=vmem, size = 0x20000, scoped, tag = 'input window, operand 4, single buffered']
    #allocation8 [shape = 'u8[1024]{0}', space=vmem, size = 0x400, scoped, tag = 'output window, operand 0, single buffered']
    %11 = vsyncpa [#allocation3], 0
    %12 = vsyncpa [#allocation6], 0
    %13 = vsyncpa [#allocation4], 0
    // Predicated region
    $region2: #{tiny_model_forward.1} parent=1 // pred_check
      _
    $region3: #{tiny_model_forward.1} parent=1 // pred_check_branch
      %15 = sbr.rel (0) target = $region5
    $region4: #{tiny_model_forward.1} parent=1 // pred_region
      _
    $region5: #{tiny_model_forward.1} parent=1 // pred_fallthru
      _
    // Predicated region
    $region6: #{tiny_model_forward.1} parent=1 // pred_check
      _
    $region7: #{tiny_model_forward.1} parent=1 // pred_check_branch
      %17 = sbr.rel (0) target = $region9
    $region8: #{tiny_model_forward.1} parent=1 // pred_region
      %19 = vsyncadd [#allocation3], 0
      %s20 = sshll.u32 %s1, 4
      %s21 = int_to_ptr.hbm [resolvable:$true] %s20
      %s22 = sshll.u32 [#allocation2], 4
      %s23 = int_to_ptr.vmem [resolvable:$true] %s22
      %28 = dma.hbm_to_vmem [thread:$0]  %s21, 16384, %s23, [#allocation3], 128, 128, 8
    $region9: #{tiny_model_forward.1} parent=1 // pred_fallthru
      _
    // Predicated region
    $region10: #{tiny_model_forward.1} parent=1 // pred_check
      _
    $region11: #{tiny_model_forward.1} parent=1 // pred_check_branch
      %30 = sbr.rel (0) target = $region13
    $region12: #{tiny_model_forward.1} parent=1 // pred_region
      %32 = vsyncadd [#allocation6], 0
      %s33 = sshll.u32 %s2, 4
      %s34 = int_to_ptr.hbm [resolvable:$true] %s33
      %s35 = sshll.u32 [#allocation5], 4
      %s36 = int_to_ptr.vmem [resolvable:$true] %s35
      %41 = dma.hbm_to_vmem [thread:$0]  %s34, 8192, %s36, [#allocation6], 256, 256, 16
    $region13: #{tiny_model_forward.1} parent=1 // pred_fallthru
      _
    // Predicated region
    $region14: #{tiny_model_forward.1} parent=1 // pred_check
      _
    $region15: #{tiny_model_forward.1} parent=1 // pred_check_branch
      %43 = sbr.rel (0) target = $region17
    $region16: #{tiny_model_forward.1} parent=1 // pred_region
      _
    $region17: #{tiny_model_forward.1} parent=1 // pred_fallthru
      _
    // Predicated region
    $region18: #{tiny_model_forward.1} parent=1 // pred_check
      _
    $region19: #{tiny_model_forward.1} parent=1 // pred_check_branch
      %45 = sbr.rel (0) target = $region21
    $region20: #{tiny_model_forward.1} parent=1 // pred_region
      %47 = vsyncadd [#allocation6], 0
      %s48 = sshll.u32 %s4, 4
      %s49 = int_to_ptr.hbm [resolvable:$true] %s48
      %s50 = sshll.u32 [#allocation7], 4
      %s51 = int_to_ptr.vmem [resolvable:$true] %s50
      %56 = dma.hbm_to_vmem [thread:$0]  %s49, 4096, %s51, [#allocation6], 64, 64, 4
    $region21: #{tiny_model_forward.1} parent=1 // pred_fallthru
      _
    // Predicated region
    $region22: #{tiny_model_forward.1} parent=1 // pred_check
      _
    $region23: #{tiny_model_forward.1} parent=1 // pred_check_branch
      %58 = sbr.rel (0) target = $region25
    $region24: #{tiny_model_forward.1} parent=1 // pred_region
      _
    $region25: #{tiny_model_forward.1} parent=1 // pred_fallthru
      _
    // Predicated region
    $region26: #{tiny_model_forward.1} parent=1 // pred_check
      _
    $region27: #{tiny_model_forward.1} parent=1 // pred_check_branch
      %60 = sbr.rel (0) target = $region29
    $region28: #{tiny_model_forward.1} parent=1 // pred_region
      %62 = dma.done [#allocation3], 16384
    $region29: #{tiny_model_forward.1} parent=1 // pred_fallthru
      _
    // Predicated region
    $region30: #{tiny_model_forward.1} parent=1 // pred_check
      _
    $region31: #{tiny_model_forward.1} parent=1 // pred_check_branch
      %64 = sbr.rel (0) target = $region33
    $region32: #{tiny_model_forward.1} parent=1 // pred_region
      %66 = dma.done [#allocation6], 8192
    $region33: #{tiny_model_forward.1} parent=1 // pred_fallthru
      _
    // Predicated region
    $region34: #{tiny_model_forward.1} parent=1 // pred_check
      _
    $region35: #{tiny_model_forward.1} parent=1 // pred_check_branch
      %68 = sbr.rel (0) target = $region37
    $region36: #{tiny_model_forward.1} parent=1 // pred_region
      %70 = dma.done [#allocation6], 4096
    $region37: #{tiny_model_forward.1} parent=1 // pred_fallthru
      _
    %v71 = vld [vmem:[%s0] sm:$0xff]
    %v72 = vld [vmem:[%s0 + $0x8] sm:$0xff]
    %75 = vst [vmem:[#allocation1] ss:$4 sm:$0xff] %v71
    %s76 = scalar_lea.vmem [#allocation1], 32
    %77 = vst [vmem:[%s76] ss:$4 sm:$0xff] %v72
    %v78 = vld.sshfl [vmem:[#allocation1] sm:$0xff pattern:$0x73625140]
    %v79 = vld.sshfl [vmem:[#allocation1 + $0x8] sm:$0xff pattern:$0x73625140]
    %v80 = vld.sshfl [vmem:[#allocation1 + $0x10] sm:$0xff pattern:$0x73625140]
    %v81 = vld.sshfl [vmem:[#allocation1 + $0x18] sm:$0xff pattern:$0x73625140]
    %v82 = vld.sshfl [vmem:[#allocation1 + $0x20] sm:$0xff pattern:$0x73625140]
    %v83 = vld.sshfl [vmem:[#allocation1 + $0x28] sm:$0xff pattern:$0x73625140]
    %v84 = vld.sshfl [vmem:[#allocation1 + $0x30] sm:$0xff pattern:$0x73625140]
    %v85 = vld.sshfl [vmem:[#allocation1 + $0x38] sm:$0xff pattern:$0x73625140]
    %v94 = vpack.c.bf16 %v78, %v78
    %v95 = vpack.c.bf16 %v79, %v79
    %v96 = vpack.c.bf16 %v80, %v80
    %v97 = vpack.c.bf16 %v81, %v81
    %v98 = vpack.c.bf16 %v82, %v82
    %v99 = vpack.c.bf16 %v83, %v83
    %v100 = vpack.c.bf16 %v84, %v84
    %v101 = vpack.c.bf16 %v85, %v85
    %v102 = vld [vmem:[#allocation2] sm:$0xff]
    %v103 = vld [vmem:[#allocation2 + $0x8] sm:$0xff]
    %v104 = vld [vmem:[#allocation2 + $0x10] sm:$0xff]
    %v105 = vld [vmem:[#allocation2 + $0x18] sm:$0xff]
    %v106 = vld [vmem:[#allocation2 + $0x20] sm:$0xff]
    %v107 = vld [vmem:[#allocation2 + $0x28] sm:$0xff]
    %v108 = vld [vmem:[#allocation2 + $0x30] sm:$0xff]
    %v109 = vld [vmem:[#allocation2 + $0x38] sm:$0xff]
    %v110 = vld [vmem:[#allocation2 + $0x40] sm:$0xff]
    %v111 = vld [vmem:[#allocation2 + $0x48] sm:$0xff]
    %v112 = vld [vmem:[#allocation2 + $0x50] sm:$0xff]
    %v113 = vld [vmem:[#allocation2 + $0x58] sm:$0xff]
    %v114 = vld [vmem:[#allocation2 + $0x60] sm:$0xff]
    %v115 = vld [vmem:[#allocation2 + $0x68] sm:$0xff]
    %v116 = vld [vmem:[#allocation2 + $0x70] sm:$0xff]
    %v117 = vld [vmem:[#allocation2 + $0x78] sm:$0xff]
    %v118 = vld [vmem:[#allocation2 + $0x80] sm:$0xff]
    %v119 = vld [vmem:[#allocation2 + $0x88] sm:$0xff]
    %v120 = vld [vmem:[#allocation2 + $0x90] sm:$0xff]
    %v121 = vld [vmem:[#allocation2 + $0x98] sm:$0xff]
    %v122 = vld [vmem:[#allocation2 + $0xa0] sm:$0xff]
    %v123 = vld [vmem:[#allocation2 + $0xa8] sm:$0xff]
    %v124 = vld [vmem:[#allocation2 + $0xb0] sm:$0xff]
    %v125 = vld [vmem:[#allocation2 + $0xb8] sm:$0xff]
    %v126 = vld [vmem:[#allocation2 + $0xc0] sm:$0xff]
    %v127 = vld [vmem:[#allocation2 + $0xc8] sm:$0xff]
    %v128 = vld [vmem:[#allocation2 + $0xd0] sm:$0xff]
    %v129 = vld [vmem:[#allocation2 + $0xd8] sm:$0xff]
    %v130 = vld [vmem:[#allocation2 + $0xe0] sm:$0xff]
    %v131 = vld [vmem:[#allocation2 + $0xe8] sm:$0xff]
    %v132 = vld [vmem:[#allocation2 + $0xf0] sm:$0xff]
    %v133 = vld [vmem:[#allocation2 + $0xf8] sm:$0xff]
    %v134 = vld [vmem:[#allocation2 + $0x100] sm:$0xff]
    %v135 = vld [vmem:[#allocation2 + $0x108] sm:$0xff]
    %v136 = vld [vmem:[#allocation2 + $0x110] sm:$0xff]
    %v137 = vld [vmem:[#allocation2 + $0x118] sm:$0xff]
    %v138 = vld [vmem:[#allocation2 + $0x120] sm:$0xff]
    %v139 = vld [vmem:[#allocation2 + $0x128] sm:$0xff]
    %v140 = vld [vmem:[#allocation2 + $0x130] sm:$0xff]
    %v141 = vld [vmem:[#allocation2 + $0x138] sm:$0xff]
    %v142 = vld [vmem:[#allocation2 + $0x140] sm:$0xff]
    %v143 = vld [vmem:[#allocation2 + $0x148] sm:$0xff]
    %v144 = vld [vmem:[#allocation2 + $0x150] sm:$0xff]
    %v145 = vld [vmem:[#allocation2 + $0x158] sm:$0xff]
    %v146 = vld [vmem:[#allocation2 + $0x160] sm:$0xff]
    %v147 = vld [vmem:[#allocation2 + $0x168] sm:$0xff]
    %v148 = vld [vmem:[#allocation2 + $0x170] sm:$0xff]
    %v149 = vld [vmem:[#allocation2 + $0x178] sm:$0xff]
    %v150 = vld [vmem:[#allocation2 + $0x180] sm:$0xff]
    %v151 = vld [vmem:[#allocation2 + $0x188] sm:$0xff]
    %v152 = vld [vmem:[#allocation2 + $0x190] sm:$0xff]
    %v153 = vld [vmem:[#allocation2 + $0x198] sm:$0xff]
    %v154 = vld [vmem:[#allocation2 + $0x1a0] sm:$0xff]
    %v155 = vld [vmem:[#allocation2 + $0x1a8] sm:$0xff]
    %v156 = vld [vmem:[#allocation2 + $0x1b0] sm:$0xff]
    %v157 = vld [vmem:[#allocation2 + $0x1b8] sm:$0xff]
    %v158 = vld [vmem:[#allocation2 + $0x1c0] sm:$0xff]
    %v159 = vld [vmem:[#allocation2 + $0x1c8] sm:$0xff]
    %v160 = vld [vmem:[#allocation2 + $0x1d0] sm:$0xff]
    %v161 = vld [vmem:[#allocation2 + $0x1d8] sm:$0xff]
    %v162 = vld [vmem:[#allocation2 + $0x1e0] sm:$0xff]
    %v163 = vld [vmem:[#allocation2 + $0x1e8] sm:$0xff]
    %v164 = vld [vmem:[#allocation2 + $0x1f0] sm:$0xff]
    %v165 = vld [vmem:[#allocation2 + $0x1f8] sm:$0xff]
    %v166 = vld [vmem:[#allocation2 + $0x200] sm:$0xff]
    %v167 = vld [vmem:[#allocation2 + $0x208] sm:$0xff]
    %v168 = vld [vmem:[#allocation2 + $0x210] sm:$0xff]
    %v169 = vld [vmem:[#allocation2 + $0x218] sm:$0xff]
    %v170 = vld [vmem:[#allocation2 + $0x220] sm:$0xff]
    %v171 = vld [vmem:[#allocation2 + $0x228] sm:$0xff]
    %v172 = vld [vmem:[#allocation2 + $0x230] sm:$0xff]
    %v173 = vld [vmem:[#allocation2 + $0x238] sm:$0xff]
    %v174 = vld [vmem:[#allocation2 + $0x240] sm:$0xff]
    %v175 = vld [vmem:[#allocation2 + $0x248] sm:$0xff]
    %v176 = vld [vmem:[#allocation2 + $0x250] sm:$0xff]
    %v177 = vld [vmem:[#allocation2 + $0x258] sm:$0xff]
    %v178 = vld [vmem:[#allocation2 + $0x260] sm:$0xff]
    %v179 = vld [vmem:[#allocation2 + $0x268] sm:$0xff]
    %v180 = vld [vmem:[#allocation2 + $0x270] sm:$0xff]
    %v181 = vld [vmem:[#allocation2 + $0x278] sm:$0xff]
    %v182 = vld [vmem:[#allocation2 + $0x280] sm:$0xff]
    %v183 = vld [vmem:[#allocation2 + $0x288] sm:$0xff]
    %v184 = vld [vmem:[#allocation2 + $0x290] sm:$0xff]
    %v185 = vld [vmem:[#allocation2 + $0x298] sm:$0xff]
    %v186 = vld [vmem:[#allocation2 + $0x2a0] sm:$0xff]
    %v187 = vld [vmem:[#allocation2 + $0x2a8] sm:$0xff]
    %v188 = vld [vmem:[#allocation2 + $0x2b0] sm:$0xff]
    %v189 = vld [vmem:[#allocation2 + $0x2b8] sm:$0xff]
    %v190 = vld [vmem:[#allocation2 + $0x2c0] sm:$0xff]
    %v191 = vld [vmem:[#allocation2 + $0x2c8] sm:$0xff]
    %v192 = vld [vmem:[#allocation2 + $0x2d0] sm:$0xff]
    %v193 = vld [vmem:[#allocation2 + $0x2d8] sm:$0xff]
    %v194 = vld [vmem:[#allocation2 + $0x2e0] sm:$0xff]
    %v195 = vld [vmem:[#allocation2 + $0x2e8] sm:$0xff]
    %v196 = vld [vmem:[#allocation2 + $0x2f0] sm:$0xff]
    %v197 = vld [vmem:[#allocation2 + $0x2f8] sm:$0xff]
    %v198 = vld [vmem:[#allocation2 + $0x300] sm:$0xff]
    %v199 = vld [vmem:[#allocation2 + $0x308] sm:$0xff]
    %v200 = vld [vmem:[#allocation2 + $0x310] sm:$0xff]
    %v201 = vld [vmem:[#allocation2 + $0x318] sm:$0xff]
    %v202 = vld [vmem:[#allocation2 + $0x320] sm:$0xff]
    %v203 = vld [vmem:[#allocation2 + $0x328] sm:$0xff]
    %v204 = vld [vmem:[#allocation2 + $0x330] sm:$0xff]
    %v205 = vld [vmem:[#allocation2 + $0x338] sm:$0xff]
    %v206 = vld [vmem:[#allocation2 + $0x340] sm:$0xff]
    %v207 = vld [vmem:[#allocation2 + $0x348] sm:$0xff]
    %v208 = vld [vmem:[#allocation2 + $0x350] sm:$0xff]
    %v209 = vld [vmem:[#allocation2 + $0x358] sm:$0xff]
    %v210 = vld [vmem:[#allocation2 + $0x360] sm:$0xff]
    %v211 = vld [vmem:[#allocation2 + $0x368] sm:$0xff]
    %v212 = vld [vmem:[#allocation2 + $0x370] sm:$0xff]
    %v213 = vld [vmem:[#allocation2 + $0x378] sm:$0xff]
    %v214 = vld [vmem:[#allocation2 + $0x380] sm:$0xff]
    %v215 = vld [vmem:[#allocation2 + $0x388] sm:$0xff]
    %v216 = vld [vmem:[#allocation2 + $0x390] sm:$0xff]
    %v217 = vld [vmem:[#allocation2 + $0x398] sm:$0xff]
    %v218 = vld [vmem:[#allocation2 + $0x3a0] sm:$0xff]
    %v219 = vld [vmem:[#allocation2 + $0x3a8] sm:$0xff]
    %v220 = vld [vmem:[#allocation2 + $0x3b0] sm:$0xff]
    %v221 = vld [vmem:[#allocation2 + $0x3b8] sm:$0xff]
    %v222 = vld [vmem:[#allocation2 + $0x3c0] sm:$0xff]
    %v223 = vld [vmem:[#allocation2 + $0x3c8] sm:$0xff]
    %v224 = vld [vmem:[#allocation2 + $0x3d0] sm:$0xff]
    %v225 = vld [vmem:[#allocation2 + $0x3d8] sm:$0xff]
    %v226 = vld [vmem:[#allocation2 + $0x3e0] sm:$0xff]
    %v227 = vld [vmem:[#allocation2 + $0x3e8] sm:$0xff]
    %v228 = vld [vmem:[#allocation2 + $0x3f0] sm:$0xff]
    %v229 = vld [vmem:[#allocation2 + $0x3f8] sm:$0xff]
    %v358 = vunpack.c.l.b16 %v102
    %v359 = vunpack.c.h.b16 %v102
    %v360 = vunpack.c.l.b16 %v103
    %v361 = vunpack.c.h.b16 %v103
    %v362 = vunpack.c.l.b16 %v104
    %v363 = vunpack.c.h.b16 %v104
    %v364 = vunpack.c.l.b16 %v105
    %v365 = vunpack.c.h.b16 %v105
    %v366 = vunpack.c.l.b16 %v106
    %v367 = vunpack.c.h.b16 %v106
    %v368 = vunpack.c.l.b16 %v107
    %v369 = vunpack.c.h.b16 %v107
    %v370 = vunpack.c.l.b16 %v108
    %v371 = vunpack.c.h.b16 %v108
    %v372 = vunpack.c.l.b16 %v109
    %v373 = vunpack.c.h.b16 %v109
    %v374 = vunpack.c.l.b16 %v110
    %v375 = vunpack.c.h.b16 %v110
    %v376 = vunpack.c.l.b16 %v111
    %v377 = vunpack.c.h.b16 %v111
    %v378 = vunpack.c.l.b16 %v112
    %v379 = vunpack.c.h.b16 %v112
    %v380 = vunpack.c.l.b16 %v113
    %v381 = vunpack.c.h.b16 %v113
    %v382 = vunpack.c.l.b16 %v114
    %v383 = vunpack.c.h.b16 %v114
    %v384 = vunpack.c.l.b16 %v115
    %v385 = vunpack.c.h.b16 %v115
    %v386 = vunpack.c.l.b16 %v116
    %v387 = vunpack.c.h.b16 %v116
    %v388 = vunpack.c.l.b16 %v117
    %v389 = vunpack.c.h.b16 %v117
    %v390 = vunpack.c.l.b16 %v118
    %v391 = vunpack.c.h.b16 %v118
    %v392 = vunpack.c.l.b16 %v119
    %v393 = vunpack.c.h.b16 %v119
    %v394 = vunpack.c.l.b16 %v120
    %v395 = vunpack.c.h.b16 %v120
    %v396 = vunpack.c.l.b16 %v121
    %v397 = vunpack.c.h.b16 %v121
    %v398 = vunpack.c.l.b16 %v122
    %v399 = vunpack.c.h.b16 %v122
    %v400 = vunpack.c.l.b16 %v123
    %v401 = vunpack.c.h.b16 %v123
    %v402 = vunpack.c.l.b16 %v124
    %v403 = vunpack.c.h.b16 %v124
    %v404 = vunpack.c.l.b16 %v125
    %v405 = vunpack.c.h.b16 %v125
    %v406 = vunpack.c.l.b16 %v126
    %v407 = vunpack.c.h.b16 %v126
    %v408 = vunpack.c.l.b16 %v127
    %v409 = vunpack.c.h.b16 %v127
    %v410 = vunpack.c.l.b16 %v128
    %v411 = vunpack.c.h.b16 %v128
    %v412 = vunpack.c.l.b16 %v129
    %v413 = vunpack.c.h.b16 %v129
    %v414 = vunpack.c.l.b16 %v130
    %v415 = vunpack.c.h.b16 %v130
    %v416 = vunpack.c.l.b16 %v131
    %v417 = vunpack.c.h.b16 %v131
    %v418 = vunpack.c.l.b16 %v132
    %v419 = vunpack.c.h.b16 %v132
    %v420 = vunpack.c.l.b16 %v133
    %v421 = vunpack.c.h.b16 %v133
    %v422 = vunpack.c.l.b16 %v134
    %v423 = vunpack.c.h.b16 %v134
    %v424 = vunpack.c.l.b16 %v135
    %v425 = vunpack.c.h.b16 %v135
    %v426 = vunpack.c.l.b16 %v136
    %v427 = vunpack.c.h.b16 %v136
    %v428 = vunpack.c.l.b16 %v137
    %v429 = vunpack.c.h.b16 %v137
    %v430 = vunpack.c.l.b16 %v138
    %v431 = vunpack.c.h.b16 %v138
    %v432 = vunpack.c.l.b16 %v139
    %v433 = vunpack.c.h.b16 %v139
    %v434 = vunpack.c.l.b16 %v140
    %v435 = vunpack.c.h.b16 %v140
    %v436 = vunpack.c.l.b16 %v141
    %v437 = vunpack.c.h.b16 %v141
    %v438 = vunpack.c.l.b16 %v142
    %v439 = vunpack.c.h.b16 %v142
    %v440 = vunpack.c.l.b16 %v143
    %v441 = vunpack.c.h.b16 %v143
    %v442 = vunpack.c.l.b16 %v144
    %v443 = vunpack.c.h.b16 %v144
    %v444 = vunpack.c.l.b16 %v145
    %v445 = vunpack.c.h.b16 %v145
    %v446 = vunpack.c.l.b16 %v146
    %v447 = vunpack.c.h.b16 %v146
    %v448 = vunpack.c.l.b16 %v147
    %v449 = vunpack.c.h.b16 %v147
    %v450 = vunpack.c.l.b16 %v148
    %v451 = vunpack.c.h.b16 %v148
    %v452 = vunpack.c.l.b16 %v149
    %v453 = vunpack.c.h.b16 %v149
    %v454 = vunpack.c.l.b16 %v150
    %v455 = vunpack.c.h.b16 %v150
    %v456 = vunpack.c.l.b16 %v151
    %v457 = vunpack.c.h.b16 %v151
    %v458 = vunpack.c.l.b16 %v152
    %v459 = vunpack.c.h.b16 %v152
    %v460 = vunpack.c.l.b16 %v153
    %v461 = vunpack.c.h.b16 %v153
    %v462 = vunpack.c.l.b16 %v154
    %v463 = vunpack.c.h.b16 %v154
    %v464 = vunpack.c.l.b16 %v155
    %v465 = vunpack.c.h.b16 %v155
    %v466 = vunpack.c.l.b16 %v156
    %v467 = vunpack.c.h.b16 %v156
    %v468 = vunpack.c.l.b16 %v157
    %v469 = vunpack.c.h.b16 %v157
    %v470 = vunpack.c.l.b16 %v158
    %v471 = vunpack.c.h.b16 %v158
    %v472 = vunpack.c.l.b16 %v159
    %v473 = vunpack.c.h.b16 %v159
    %v474 = vunpack.c.l.b16 %v160
    %v475 = vunpack.c.h.b16 %v160
    %v476 = vunpack.c.l.b16 %v161
    %v477 = vunpack.c.h.b16 %v161
    %v478 = vunpack.c.l.b16 %v162
    %v479 = vunpack.c.h.b16 %v162
    %v480 = vunpack.c.l.b16 %v163
    %v481 = vunpack.c.h.b16 %v163
    %v482 = vunpack.c.l.b16 %v164
    %v483 = vunpack.c.h.b16 %v164
    %v484 = vunpack.c.l.b16 %v165
    %v485 = vunpack.c.h.b16 %v165
    %v486 = vunpack.c.l.b16 %v166
    %v487 = vunpack.c.h.b16 %v166
    %v488 = vunpack.c.l.b16 %v167
    %v489 = vunpack.c.h.b16 %v167
    %v490 = vunpack.c.l.b16 %v168
    %v491 = vunpack.c.h.b16 %v168
    %v492 = vunpack.c.l.b16 %v169
    %v493 = vunpack.c.h.b16 %v169
    %v494 = vunpack.c.l.b16 %v170
    %v495 = vunpack.c.h.b16 %v170
    %v496 = vunpack.c.l.b16 %v171
    %v497 = vunpack.c.h.b16 %v171
    %v498 = vunpack.c.l.b16 %v172
    %v499 = vunpack.c.h.b16 %v172
    %v500 = vunpack.c.l.b16 %v173
    %v501 = vunpack.c.h.b16 %v173
    %v502 = vunpack.c.l.b16 %v174
    %v503 = vunpack.c.h.b16 %v174
    %v504 = vunpack.c.l.b16 %v175
    %v505 = vunpack.c.h.b16 %v175
    %v506 = vunpack.c.l.b16 %v176
    %v507 = vunpack.c.h.b16 %v176
    %v508 = vunpack.c.l.b16 %v177
    %v509 = vunpack.c.h.b16 %v177
    %v510 = vunpack.c.l.b16 %v178
    %v511 = vunpack.c.h.b16 %v178
    %v512 = vunpack.c.l.b16 %v179
    %v513 = vunpack.c.h.b16 %v179
    %v514 = vunpack.c.l.b16 %v180
    %v515 = vunpack.c.h.b16 %v180
    %v516 = vunpack.c.l.b16 %v181
    %v517 = vunpack.c.h.b16 %v181
    %v518 = vunpack.c.l.b16 %v182
    %v519 = vunpack.c.h.b16 %v182
    %v520 = vunpack.c.l.b16 %v183
    %v521 = vunpack.c.h.b16 %v183
    %v522 = vunpack.c.l.b16 %v184
    %v523 = vunpack.c.h.b16 %v184
    %v524 = vunpack.c.l.b16 %v185
    %v525 = vunpack.c.h.b16 %v185
    %v526 = vunpack.c.l.b16 %v186
    %v527 = vunpack.c.h.b16 %v186
    %v528 = vunpack.c.l.b16 %v187
    %v529 = vunpack.c.h.b16 %v187
    %v530 = vunpack.c.l.b16 %v188
    %v531 = vunpack.c.h.b16 %v188
    %v532 = vunpack.c.l.b16 %v189
    %v533 = vunpack.c.h.b16 %v189
    %v534 = vunpack.c.l.b16 %v190
    %v535 = vunpack.c.h.b16 %v190
    %v536 = vunpack.c.l.b16 %v191
    %v537 = vunpack.c.h.b16 %v191
    %v538 = vunpack.c.l.b16 %v192
    %v539 = vunpack.c.h.b16 %v192
    %v540 = vunpack.c.l.b16 %v193
    %v541 = vunpack.c.h.b16 %v193
    %v542 = vunpack.c.l.b16 %v194
    %v543 = vunpack.c.h.b16 %v194
    %v544 = vunpack.c.l.b16 %v195
    %v545 = vunpack.c.h.b16 %v195
    %v546 = vunpack.c.l.b16 %v196
    %v547 = vunpack.c.h.b16 %v196
    %v548 = vunpack.c.l.b16 %v197
    %v549 = vunpack.c.h.b16 %v197
    %v550 = vunpack.c.l.b16 %v198
    %v551 = vunpack.c.h.b16 %v198
    %v552 = vunpack.c.l.b16 %v199
    %v553 = vunpack.c.h.b16 %v199
    %v554 = vunpack.c.l.b16 %v200
    %v555 = vunpack.c.h.b16 %v200
    %v556 = vunpack.c.l.b16 %v201
    %v557 = vunpack.c.h.b16 %v201
    %v558 = vunpack.c.l.b16 %v202
    %v559 = vunpack.c.h.b16 %v202
    %v560 = vunpack.c.l.b16 %v203
    %v561 = vunpack.c.h.b16 %v203
    %v562 = vunpack.c.l.b16 %v204
    %v563 = vunpack.c.h.b16 %v204
    %v564 = vunpack.c.l.b16 %v205
    %v565 = vunpack.c.h.b16 %v205
    %v566 = vunpack.c.l.b16 %v206
    %v567 = vunpack.c.h.b16 %v206
    %v568 = vunpack.c.l.b16 %v207
    %v569 = vunpack.c.h.b16 %v207
    %v570 = vunpack.c.l.b16 %v208
    %v571 = vunpack.c.h.b16 %v208
    %v572 = vunpack.c.l.b16 %v209
    %v573 = vunpack.c.h.b16 %v209
    %v574 = vunpack.c.l.b16 %v210
    %v575 = vunpack.c.h.b16 %v210
    %v576 = vunpack.c.l.b16 %v211
    %v577 = vunpack.c.h.b16 %v211
    %v578 = vunpack.c.l.b16 %v212
    %v579 = vunpack.c.h.b16 %v212
    %v580 = vunpack.c.l.b16 %v213
    %v581 = vunpack.c.h.b16 %v213
    %v582 = vunpack.c.l.b16 %v214
    %v583 = vunpack.c.h.b16 %v214
    %v584 = vunpack.c.l.b16 %v215
    %v585 = vunpack.c.h.b16 %v215
    %v586 = vunpack.c.l.b16 %v216
    %v587 = vunpack.c.h.b16 %v216
    %v588 = vunpack.c.l.b16 %v217
    %v589 = vunpack.c.h.b16 %v217
    %v590 = vunpack.c.l.b16 %v218
    %v591 = vunpack.c.h.b16 %v218
    %v592 = vunpack.c.l.b16 %v219
    %v593 = vunpack.c.h.b16 %v219
    %v594 = vunpack.c.l.b16 %v220
    %v595 = vunpack.c.h.b16 %v220
    %v596 = vunpack.c.l.b16 %v221
    %v597 = vunpack.c.h.b16 %v221
    %v598 = vunpack.c.l.b16 %v222
    %v599 = vunpack.c.h.b16 %v222
    %v600 = vunpack.c.l.b16 %v223
    %v601 = vunpack.c.h.b16 %v223
    %v602 = vunpack.c.l.b16 %v224
    %v603 = vunpack.c.h.b16 %v224
    %v604 = vunpack.c.l.b16 %v225
    %v605 = vunpack.c.h.b16 %v225
    %v606 = vunpack.c.l.b16 %v226
    %v607 = vunpack.c.h.b16 %v226
    %v608 = vunpack.c.l.b16 %v227
    %v609 = vunpack.c.h.b16 %v227
    %v610 = vunpack.c.l.b16 %v228
    %v611 = vunpack.c.h.b16 %v228
    %v612 = vunpack.c.l.b16 %v229
    %v613 = vunpack.c.h.b16 %v229
    %v614 = vpack.c.b16 %v360, %v358
    %v615 = vpack.c.b16 %v361, %v359
    %v616 = vpack.c.b16 %v364, %v362
    %v617 = vpack.c.b16 %v365, %v363
    %v618 = vpack.c.b16 %v368, %v366
    %v619 = vpack.c.b16 %v369, %v367
    %v620 = vpack.c.b16 %v372, %v370
    %v621 = vpack.c.b16 %v373, %v371
    %v622 = vpack.c.b16 %v376, %v374
    %v623 = vpack.c.b16 %v377, %v375
    %v624 = vpack.c.b16 %v380, %v378
    %v625 = vpack.c.b16 %v381, %v379
    %v626 = vpack.c.b16 %v384, %v382
    %v627 = vpack.c.b16 %v385, %v383
    %v628 = vpack.c.b16 %v388, %v386
    %v629 = vpack.c.b16 %v389, %v387
    %v630 = vpack.c.b16 %v392, %v390
    %v631 = vpack.c.b16 %v393, %v391
    %v632 = vpack.c.b16 %v396, %v394
    %v633 = vpack.c.b16 %v397, %v395
    %v634 = vpack.c.b16 %v400, %v398
    %v635 = vpack.c.b16 %v401, %v399
    %v636 = vpack.c.b16 %v404, %v402
    %v637 = vpack.c.b16 %v405, %v403
    %v638 = vpack.c.b16 %v408, %v406
    %v639 = vpack.c.b16 %v409, %v407
    %v640 = vpack.c.b16 %v412, %v410
    %v641 = vpack.c.b16 %v413, %v411
    %v642 = vpack.c.b16 %v416, %v414
    %v643 = vpack.c.b16 %v417, %v415
    %v644 = vpack.c.b16 %v420, %v418
    %v645 = vpack.c.b16 %v421, %v419
    %v646 = vpack.c.b16 %v424, %v422
    %v647 = vpack.c.b16 %v425, %v423
    %v648 = vpack.c.b16 %v428, %v426
    %v649 = vpack.c.b16 %v429, %v427
    %v650 = vpack.c.b16 %v432, %v430
    %v651 = vpack.c.b16 %v433, %v431
    %v652 = vpack.c.b16 %v436, %v434
    %v653 = vpack.c.b16 %v437, %v435
    %v654 = vpack.c.b16 %v440, %v438
    %v655 = vpack.c.b16 %v441, %v439
    %v656 = vpack.c.b16 %v444, %v442
    %v657 = vpack.c.b16 %v445, %v443
    %v658 = vpack.c.b16 %v448, %v446
    %v659 = vpack.c.b16 %v449, %v447
    %v660 = vpack.c.b16 %v452, %v450
    %v661 = vpack.c.b16 %v453, %v451
    %v662 = vpack.c.b16 %v456, %v454
    %v663 = vpack.c.b16 %v457, %v455
    %v664 = vpack.c.b16 %v460, %v458
    %v665 = vpack.c.b16 %v461, %v459
    %v666 = vpack.c.b16 %v464, %v462
    %v667 = vpack.c.b16 %v465, %v463
    %v668 = vpack.c.b16 %v468, %v466
    %v669 = vpack.c.b16 %v469, %v467
    %v670 = vpack.c.b16 %v472, %v470
    %v671 = vpack.c.b16 %v473, %v471
    %v672 = vpack.c.b16 %v476, %v474
    %v673 = vpack.c.b16 %v477, %v475
    %v674 = vpack.c.b16 %v480, %v478
    %v675 = vpack.c.b16 %v481, %v479
    %v676 = vpack.c.b16 %v484, %v482
    %v677 = vpack.c.b16 %v485, %v483
    %v678 = vpack.c.b16 %v488, %v486
    %v679 = vpack.c.b16 %v489, %v487
    %v680 = vpack.c.b16 %v492, %v490
    %v681 = vpack.c.b16 %v493, %v491
    %v682 = vpack.c.b16 %v496, %v494
    %v683 = vpack.c.b16 %v497, %v495
    %v684 = vpack.c.b16 %v500, %v498
    %v685 = vpack.c.b16 %v501, %v499
    %v686 = vpack.c.b16 %v504, %v502
    %v687 = vpack.c.b16 %v505, %v503
    %v688 = vpack.c.b16 %v508, %v506
    %v689 = vpack.c.b16 %v509, %v507
    %v690 = vpack.c.b16 %v512, %v510
    %v691 = vpack.c.b16 %v513, %v511
    %v692 = vpack.c.b16 %v516, %v514
    %v693 = vpack.c.b16 %v517, %v515
    %v694 = vpack.c.b16 %v520, %v518
    %v695 = vpack.c.b16 %v521, %v519
    %v696 = vpack.c.b16 %v524, %v522
    %v697 = vpack.c.b16 %v525, %v523
    %v698 = vpack.c.b16 %v528, %v526
    %v699 = vpack.c.b16 %v529, %v527
    %v700 = vpack.c.b16 %v532, %v530
    %v701 = vpack.c.b16 %v533, %v531
    %v702 = vpack.c.b16 %v536, %v534
    %v703 = vpack.c.b16 %v537, %v535
    %v704 = vpack.c.b16 %v540, %v538
    %v705 = vpack.c.b16 %v541, %v539
    %v706 = vpack.c.b16 %v544, %v542
    %v707 = vpack.c.b16 %v545, %v543
    %v708 = vpack.c.b16 %v548, %v546
    %v709 = vpack.c.b16 %v549, %v547
    %v710 = vpack.c.b16 %v552, %v550
    %v711 = vpack.c.b16 %v553, %v551
    %v712 = vpack.c.b16 %v556, %v554
    %v713 = vpack.c.b16 %v557, %v555
    %v714 = vpack.c.b16 %v560, %v558
    %v715 = vpack.c.b16 %v561, %v559
    %v716 = vpack.c.b16 %v564, %v562
    %v717 = vpack.c.b16 %v565, %v563
    %v718 = vpack.c.b16 %v568, %v566
    %v719 = vpack.c.b16 %v569, %v567
    %v720 = vpack.c.b16 %v572, %v570
    %v721 = vpack.c.b16 %v573, %v571
    %v722 = vpack.c.b16 %v576, %v574
    %v723 = vpack.c.b16 %v577, %v575
    %v724 = vpack.c.b16 %v580, %v578
    %v725 = vpack.c.b16 %v581, %v579
    %v726 = vpack.c.b16 %v584, %v582
    %v727 = vpack.c.b16 %v585, %v583
    %v728 = vpack.c.b16 %v588, %v586
    %v729 = vpack.c.b16 %v589, %v587
    %v730 = vpack.c.b16 %v592, %v590
    %v731 = vpack.c.b16 %v593, %v591
    %v732 = vpack.c.b16 %v596, %v594
    %v733 = vpack.c.b16 %v597, %v595
    %v734 = vpack.c.b16 %v600, %v598
    %v735 = vpack.c.b16 %v601, %v599
    %v736 = vpack.c.b16 %v604, %v602
    %v737 = vpack.c.b16 %v605, %v603
    %v738 = vpack.c.b16 %v608, %v606
    %v739 = vpack.c.b16 %v609, %v607
    %v740 = vpack.c.b16 %v612, %v610
    %v741 = vpack.c.b16 %v613, %v611
    %870 = vmatpush.bf16.msra.mxu0 %v628
    %871 = vmatpush.bf16.msra.mxu0 %v626
    %872 = vmatpush.bf16.msra.mxu0 %v624
    %873 = vmatpush.bf16.msra.mxu0 %v622
    %874 = vmatpush.bf16.msra.mxu0 %v620
    %875 = vmatpush.bf16.msra.mxu0 %v618
    %876 = vmatpush.bf16.msra.mxu0 %v616
    %877 = vmatpush.bf16.msra.mxu0 %v614
    %878 = vmatmul.bf16.gmra.mxu0 %v94
    %v879 = vpop.f32.mrf.mxu0
    %v880 = vadd.f32 0.0, %v879
    %v881 = vpop.f32.mrf.mxu0
    %882 = vdwg.mxu0
    %883 = vmatpush.bf16.msra.mxu0 %v644
    %884 = vmatpush.bf16.msra.mxu0 %v642
    %885 = vmatpush.bf16.msra.mxu0 %v640
    %886 = vmatpush.bf16.msra.mxu0 %v638
    %887 = vmatpush.bf16.msra.mxu0 %v636
    %888 = vmatpush.bf16.msra.mxu0 %v634
    %889 = vmatpush.bf16.msra.mxu0 %v632
    %890 = vmatpush.bf16.msra.mxu0 %v630
    %891 = vmatmul.bf16.gmra.mxu0 %v95
    %v892 = vpop.f32.mrf.mxu0
    %v893 = vadd.f32 %v880, %v892
    %v894 = vpop.f32.mrf.mxu0
    %895 = vdwg.mxu0
    %896 = vmatpush.bf16.msra.mxu0 %v660
    %897 = vmatpush.bf16.msra.mxu0 %v658
    %898 = vmatpush.bf16.msra.mxu0 %v656
    %899 = vmatpush.bf16.msra.mxu0 %v654
    %900 = vmatpush.bf16.msra.mxu0 %v652
    %901 = vmatpush.bf16.msra.mxu0 %v650
    %902 = vmatpush.bf16.msra.mxu0 %v648
    %903 = vmatpush.bf16.msra.mxu0 %v646
    %904 = vmatmul.bf16.gmra.mxu0 %v96
    %v905 = vpop.f32.mrf.mxu0
    %v906 = vadd.f32 %v893, %v905
    %v907 = vpop.f32.mrf.mxu0
    %908 = vdwg.mxu0
    %909 = vmatpush.bf16.msra.mxu0 %v676
    %910 = vmatpush.bf16.msra.mxu0 %v674
    %911 = vmatpush.bf16.msra.mxu0 %v672
    %912 = vmatpush.bf16.msra.mxu0 %v670
    %913 = vmatpush.bf16.msra.mxu0 %v668
    %914 = vmatpush.bf16.msra.mxu0 %v666
    %915 = vmatpush.bf16.msra.mxu0 %v664
    %916 = vmatpush.bf16.msra.mxu0 %v662
    %917 = vmatmul.bf16.gmra.mxu0 %v97
    %v918 = vpop.f32.mrf.mxu0
    %v919 = vadd.f32 %v906, %v918
    %v920 = vpop.f32.mrf.mxu0
    %921 = vdwg.mxu0
    %922 = vmatpush.bf16.msra.mxu0 %v692
    %923 = vmatpush.bf16.msra.mxu0 %v690
    %924 = vmatpush.bf16.msra.mxu0 %v688
    %925 = vmatpush.bf16.msra.mxu0 %v686
    %926 = vmatpush.bf16.msra.mxu0 %v684
    %927 = vmatpush.bf16.msra.mxu0 %v682
    %928 = vmatpush.bf16.msra.mxu0 %v680
    %929 = vmatpush.bf16.msra.mxu0 %v678
    %930 = vmatmul.bf16.gmra.mxu0 %v98
    %v931 = vpop.f32.mrf.mxu0
    %v932 = vadd.f32 %v919, %v931
    %v933 = vpop.f32.mrf.mxu0
    %934 = vdwg.mxu0
    %935 = vmatpush.bf16.msra.mxu0 %v708
    %936 = vmatpush.bf16.msra.mxu0 %v706
    %937 = vmatpush.bf16.msra.mxu0 %v704
    %938 = vmatpush.bf16.msra.mxu0 %v702
    %939 = vmatpush.bf16.msra.mxu0 %v700
    %940 = vmatpush.bf16.msra.mxu0 %v698
    %941 = vmatpush.bf16.msra.mxu0 %v696
    %942 = vmatpush.bf16.msra.mxu0 %v694
    %943 = vmatmul.bf16.gmra.mxu0 %v99
    %v944 = vpop.f32.mrf.mxu0
    %v945 = vadd.f32 %v932, %v944
    %v946 = vpop.f32.mrf.mxu0
    %947 = vdwg.mxu0
    %948 = vmatpush.bf16.msra.mxu0 %v724
    %949 = vmatpush.bf16.msra.mxu0 %v722
    %950 = vmatpush.bf16.msra.mxu0 %v720
    %951 = vmatpush.bf16.msra.mxu0 %v718
    %952 = vmatpush.bf16.msra.mxu0 %v716
    %953 = vmatpush.bf16.msra.mxu0 %v714
    %954 = vmatpush.bf16.msra.mxu0 %v712
    %955 = vmatpush.bf16.msra.mxu0 %v710
    %956 = vmatmul.bf16.gmra.mxu0 %v100
    %v957 = vpop.f32.mrf.mxu0
    %v958 = vadd.f32 %v945, %v957
    %v959 = vpop.f32.mrf.mxu0
    %960 = vdwg.mxu0
    %961 = vmatpush.bf16.msra.mxu0 %v740
    %962 = vmatpush.bf16.msra.mxu0 %v738
    %963 = vmatpush.bf16.msra.mxu0 %v736
    %964 = vmatpush.bf16.msra.mxu0 %v734
    %965 = vmatpush.bf16.msra.mxu0 %v732
    %966 = vmatpush.bf16.msra.mxu0 %v730
    %967 = vmatpush.bf16.msra.mxu0 %v728
    %968 = vmatpush.bf16.msra.mxu0 %v726
    %969 = vmatmul.bf16.gmra.mxu0 %v101
    %v970 = vpop.f32.mrf.mxu0
    %v971 = vadd.f32 %v958, %v970
    %v972 = vpop.f32.mrf.mxu0
    %973 = vdwg.mxu0
    %974 = vmatpush.bf16.msra.mxu0 %v629
    %975 = vmatpush.bf16.msra.mxu0 %v627
    %976 = vmatpush.bf16.msra.mxu0 %v625
    %977 = vmatpush.bf16.msra.mxu0 %v623
    %978 = vmatpush.bf16.msra.mxu0 %v621
    %979 = vmatpush.bf16.msra.mxu0 %v619
    %980 = vmatpush.bf16.msra.mxu0 %v617
    %981 = vmatpush.bf16.msra.mxu0 %v615
    %982 = vmatmul.bf16.gmra.mxu0 %v94
    %v983 = vpop.f32.mrf.mxu0
    %v984 = vadd.f32 0.0, %v983
    %v985 = vpop.f32.mrf.mxu0
    %986 = vdwg.mxu0
    %987 = vmatpush.bf16.msra.mxu0 %v645
    %988 = vmatpush.bf16.msra.mxu0 %v643
    %989 = vmatpush.bf16.msra.mxu0 %v641
    %990 = vmatpush.bf16.msra.mxu0 %v639
    %991 = vmatpush.bf16.msra.mxu0 %v637
    %992 = vmatpush.bf16.msra.mxu0 %v635
    %993 = vmatpush.bf16.msra.mxu0 %v633
    %994 = vmatpush.bf16.msra.mxu0 %v631
    %995 = vmatmul.bf16.gmra.mxu0 %v95
    %v996 = vpop.f32.mrf.mxu0
    %v997 = vadd.f32 %v984, %v996
    %v998 = vpop.f32.mrf.mxu0
    %999 = vdwg.mxu0
    %1000 = vmatpush.bf16.msra.mxu0 %v661
    %1001 = vmatpush.bf16.msra.mxu0 %v659
    %1002 = vmatpush.bf16.msra.mxu0 %v657
    %1003 = vmatpush.bf16.msra.mxu0 %v655
    %1004 = vmatpush.bf16.msra.mxu0 %v653
    %1005 = vmatpush.bf16.msra.mxu0 %v651
    %1006 = vmatpush.bf16.msra.mxu0 %v649
    %1007 = vmatpush.bf16.msra.mxu0 %v647
    %1008 = vmatmul.bf16.gmra.mxu0 %v96
    %v1009 = vpop.f32.mrf.mxu0
    %v1010 = vadd.f32 %v997, %v1009
    %v1011 = vpop.f32.mrf.mxu0
    %1012 = vdwg.mxu0
    %1013 = vmatpush.bf16.msra.mxu0 %v677
    %1014 = vmatpush.bf16.msra.mxu0 %v675
    %1015 = vmatpush.bf16.msra.mxu0 %v673
    %1016 = vmatpush.bf16.msra.mxu0 %v671
    %1017 = vmatpush.bf16.msra.mxu0 %v669
    %1018 = vmatpush.bf16.msra.mxu0 %v667
    %1019 = vmatpush.bf16.msra.mxu0 %v665
    %1020 = vmatpush.bf16.msra.mxu0 %v663
    %1021 = vmatmul.bf16.gmra.mxu0 %v97
    %v1022 = vpop.f32.mrf.mxu0
    %v1023 = vadd.f32 %v1010, %v1022
    %v1024 = vpop.f32.mrf.mxu0
    %1025 = vdwg.mxu0
    %1026 = vmatpush.bf16.msra.mxu0 %v693
    %1027 = vmatpush.bf16.msra.mxu0 %v691
    %1028 = vmatpush.bf16.msra.mxu0 %v689
    %1029 = vmatpush.bf16.msra.mxu0 %v687
    %1030 = vmatpush.bf16.msra.mxu0 %v685
    %1031 = vmatpush.bf16.msra.mxu0 %v683
    %1032 = vmatpush.bf16.msra.mxu0 %v681
    %1033 = vmatpush.bf16.msra.mxu0 %v679
    %1034 = vmatmul.bf16.gmra.mxu0 %v98
    %v1035 = vpop.f32.mrf.mxu0
    %v1036 = vadd.f32 %v1023, %v1035
    %v1037 = vpop.f32.mrf.mxu0
    %1038 = vdwg.mxu0
    %1039 = vmatpush.bf16.msra.mxu0 %v709
    %1040 = vmatpush.bf16.msra.mxu0 %v707
    %1041 = vmatpush.bf16.msra.mxu0 %v705
    %1042 = vmatpush.bf16.msra.mxu0 %v703
    %1043 = vmatpush.bf16.msra.mxu0 %v701
    %1044 = vmatpush.bf16.msra.mxu0 %v699
    %1045 = vmatpush.bf16.msra.mxu0 %v697
    %1046 = vmatpush.bf16.msra.mxu0 %v695
    %1047 = vmatmul.bf16.gmra.mxu0 %v99
    %v1048 = vpop.f32.mrf.mxu0
    %v1049 = vadd.f32 %v1036, %v1048
    %v1050 = vpop.f32.mrf.mxu0
    %1051 = vdwg.mxu0
    %1052 = vmatpush.bf16.msra.mxu0 %v725
    %1053 = vmatpush.bf16.msra.mxu0 %v723
    %1054 = vmatpush.bf16.msra.mxu0 %v721
    %1055 = vmatpush.bf16.msra.mxu0 %v719
    %1056 = vmatpush.bf16.msra.mxu0 %v717
    %1057 = vmatpush.bf16.msra.mxu0 %v715
    %1058 = vmatpush.bf16.msra.mxu0 %v713
    %1059 = vmatpush.bf16.msra.mxu0 %v711
    %1060 = vmatmul.bf16.gmra.mxu0 %v100
    %v1061 = vpop.f32.mrf.mxu0
    %v1062 = vadd.f32 %v1049, %v1061
    %v1063 = vpop.f32.mrf.mxu0
    %1064 = vdwg.mxu0
    %1065 = vmatpush.bf16.msra.mxu0 %v741
    %1066 = vmatpush.bf16.msra.mxu0 %v739
    %1067 = vmatpush.bf16.msra.mxu0 %v737
    %1068 = vmatpush.bf16.msra.mxu0 %v735
    %1069 = vmatpush.bf16.msra.mxu0 %v733
    %1070 = vmatpush.bf16.msra.mxu0 %v731
    %1071 = vmatpush.bf16.msra.mxu0 %v729
    %1072 = vmatpush.bf16.msra.mxu0 %v727
    %1073 = vmatmul.bf16.gmra.mxu0 %v101
    %v1074 = vpop.f32.mrf.mxu0
    %v1075 = vadd.f32 %v1062, %v1074
    %v1076 = vpop.f32.mrf.mxu0
    %1077 = vdwg.mxu0
    %v1078 = vpack.c.bf16 %v971, %v971
    %v1079 = vpack.c.bf16 %v1075, %v1075
    %v1080 = vld [vmem:[#allocation5] sm:$0xff]
    %v1081 = vld [vmem:[#allocation5 + $0x8] sm:$0xff]
    %v1082 = vld [vmem:[#allocation5 + $0x10] sm:$0xff]
    %v1083 = vld [vmem:[#allocation5 + $0x18] sm:$0xff]
    %v1084 = vld [vmem:[#allocation5 + $0x20] sm:$0xff]
    %v1085 = vld [vmem:[#allocation5 + $0x28] sm:$0xff]
    %v1086 = vld [vmem:[#allocation5 + $0x30] sm:$0xff]
    %v1087 = vld [vmem:[#allocation5 + $0x38] sm:$0xff]
    %v1088 = vld [vmem:[#allocation5 + $0x40] sm:$0xff]
    %v1089 = vld [vmem:[#allocation5 + $0x48] sm:$0xff]
    %v1090 = vld [vmem:[#allocation5 + $0x50] sm:$0xff]
    %v1091 = vld [vmem:[#allocation5 + $0x58] sm:$0xff]
    %v1092 = vld [vmem:[#allocation5 + $0x60] sm:$0xff]
    %v1093 = vld [vmem:[#allocation5 + $0x68] sm:$0xff]
    %v1094 = vld [vmem:[#allocation5 + $0x70] sm:$0xff]
    %v1095 = vld [vmem:[#allocation5 + $0x78] sm:$0xff]
    %v1096 = vld [vmem:[#allocation5 + $0x80] sm:$0xff]
    %v1097 = vld [vmem:[#allocation5 + $0x88] sm:$0xff]
    %v1098 = vld [vmem:[#allocation5 + $0x90] sm:$0xff]
    %v1099 = vld [vmem:[#allocation5 + $0x98] sm:$0xff]
    %v1100 = vld [vmem:[#allocation5 + $0xa0] sm:$0xff]
    %v1101 = vld [vmem:[#allocation5 + $0xa8] sm:$0xff]
    %v1102 = vld [vmem:[#allocation5 + $0xb0] sm:$0xff]
    %v1103 = vld [vmem:[#allocation5 + $0xb8] sm:$0xff]
    %v1104 = vld [vmem:[#allocation5 + $0xc0] sm:$0xff]
    %v1105 = vld [vmem:[#allocation5 + $0xc8] sm:$0xff]
    %v1106 = vld [vmem:[#allocation5 + $0xd0] sm:$0xff]
    %v1107 = vld [vmem:[#allocation5 + $0xd8] sm:$0xff]
    %v1108 = vld [vmem:[#allocation5 + $0xe0] sm:$0xff]
    %v1109 = vld [vmem:[#allocation5 + $0xe8] sm:$0xff]
    %v1110 = vld [vmem:[#allocation5 + $0xf0] sm:$0xff]
    %v1111 = vld [vmem:[#allocation5 + $0xf8] sm:$0xff]
    %v1112 = vld [vmem:[#allocation5 + $0x100] sm:$0xff]
    %v1113 = vld [vmem:[#allocation5 + $0x108] sm:$0xff]
    %v1114 = vld [vmem:[#allocation5 + $0x110] sm:$0xff]
    %v1115 = vld [vmem:[#allocation5 + $0x118] sm:$0xff]
    %v1116 = vld [vmem:[#allocation5 + $0x120] sm:$0xff]
    %v1117 = vld [vmem:[#allocation5 + $0x128] sm:$0xff]
    %v1118 = vld [vmem:[#allocation5 + $0x130] sm:$0xff]
    %v1119 = vld [vmem:[#allocation5 + $0x138] sm:$0xff]
    %v1120 = vld [vmem:[#allocation5 + $0x140] sm:$0xff]
    %v1121 = vld [vmem:[#allocation5 + $0x148] sm:$0xff]
    %v1122 = vld [vmem:[#allocation5 + $0x150] sm:$0xff]
    %v1123 = vld [vmem:[#allocation5 + $0x158] sm:$0xff]
    %v1124 = vld [vmem:[#allocation5 + $0x160] sm:$0xff]
    %v1125 = vld [vmem:[#allocation5 + $0x168] sm:$0xff]
    %v1126 = vld [vmem:[#allocation5 + $0x170] sm:$0xff]
    %v1127 = vld [vmem:[#allocation5 + $0x178] sm:$0xff]
    %v1128 = vld [vmem:[#allocation5 + $0x180] sm:$0xff]
    %v1129 = vld [vmem:[#allocation5 + $0x188] sm:$0xff]
    %v1130 = vld [vmem:[#allocation5 + $0x190] sm:$0xff]
    %v1131 = vld [vmem:[#allocation5 + $0x198] sm:$0xff]
    %v1132 = vld [vmem:[#allocation5 + $0x1a0] sm:$0xff]
    %v1133 = vld [vmem:[#allocation5 + $0x1a8] sm:$0xff]
    %v1134 = vld [vmem:[#allocation5 + $0x1b0] sm:$0xff]
    %v1135 = vld [vmem:[#allocation5 + $0x1b8] sm:$0xff]
    %v1136 = vld [vmem:[#allocation5 + $0x1c0] sm:$0xff]
    %v1137 = vld [vmem:[#allocation5 + $0x1c8] sm:$0xff]
    %v1138 = vld [vmem:[#allocation5 + $0x1d0] sm:$0xff]
    %v1139 = vld [vmem:[#allocation5 + $0x1d8] sm:$0xff]
    %v1140 = vld [vmem:[#allocation5 + $0x1e0] sm:$0xff]
    %v1141 = vld [vmem:[#allocation5 + $0x1e8] sm:$0xff]
    %v1142 = vld [vmem:[#allocation5 + $0x1f0] sm:$0xff]
    %v1143 = vld [vmem:[#allocation5 + $0x1f8] sm:$0xff]
    %v1144 = vld [vmem:[%s3] sm:$0xf]
    %v1146 = vperm.slane %v1144, 0
    %v1147 = vperm.slane %v1144, 1
    %v1148 = vperm.slane %v1144, 2
    %v1149 = vperm.slane %v1144, 3
    %v1218 = vunpack.c.l.b16 %v1080
    %v1219 = vunpack.c.h.b16 %v1080
    %v1220 = vunpack.c.l.b16 %v1081
    %v1221 = vunpack.c.h.b16 %v1081
    %v1222 = vunpack.c.l.b16 %v1082
    %v1223 = vunpack.c.h.b16 %v1082
    %v1224 = vunpack.c.l.b16 %v1083
    %v1225 = vunpack.c.h.b16 %v1083
    %v1226 = vunpack.c.l.b16 %v1084
    %v1227 = vunpack.c.h.b16 %v1084
    %v1228 = vunpack.c.l.b16 %v1085
    %v1229 = vunpack.c.h.b16 %v1085
    %v1230 = vunpack.c.l.b16 %v1086
    %v1231 = vunpack.c.h.b16 %v1086
    %v1232 = vunpack.c.l.b16 %v1087
    %v1233 = vunpack.c.h.b16 %v1087
    %v1234 = vunpack.c.l.b16 %v1088
    %v1235 = vunpack.c.h.b16 %v1088
    %v1236 = vunpack.c.l.b16 %v1089
    %v1237 = vunpack.c.h.b16 %v1089
    %v1238 = vunpack.c.l.b16 %v1090
    %v1239 = vunpack.c.h.b16 %v1090
    %v1240 = vunpack.c.l.b16 %v1091
    %v1241 = vunpack.c.h.b16 %v1091
    %v1242 = vunpack.c.l.b16 %v1092
    %v1243 = vunpack.c.h.b16 %v1092
    %v1244 = vunpack.c.l.b16 %v1093
    %v1245 = vunpack.c.h.b16 %v1093
    %v1246 = vunpack.c.l.b16 %v1094
    %v1247 = vunpack.c.h.b16 %v1094
    %v1248 = vunpack.c.l.b16 %v1095
    %v1249 = vunpack.c.h.b16 %v1095
    %v1250 = vunpack.c.l.b16 %v1096
    %v1251 = vunpack.c.h.b16 %v1096
    %v1252 = vunpack.c.l.b16 %v1097
    %v1253 = vunpack.c.h.b16 %v1097
    %v1254 = vunpack.c.l.b16 %v1098
    %v1255 = vunpack.c.h.b16 %v1098
    %v1256 = vunpack.c.l.b16 %v1099
    %v1257 = vunpack.c.h.b16 %v1099
    %v1258 = vunpack.c.l.b16 %v1100
    %v1259 = vunpack.c.h.b16 %v1100
    %v1260 = vunpack.c.l.b16 %v1101
    %v1261 = vunpack.c.h.b16 %v1101
    %v1262 = vunpack.c.l.b16 %v1102
    %v1263 = vunpack.c.h.b16 %v1102
    %v1264 = vunpack.c.l.b16 %v1103
    %v1265 = vunpack.c.h.b16 %v1103
    %v1266 = vunpack.c.l.b16 %v1104
    %v1267 = vunpack.c.h.b16 %v1104
    %v1268 = vunpack.c.l.b16 %v1105
    %v1269 = vunpack.c.h.b16 %v1105
    %v1270 = vunpack.c.l.b16 %v1106
    %v1271 = vunpack.c.h.b16 %v1106
    %v1272 = vunpack.c.l.b16 %v1107
    %v1273 = vunpack.c.h.b16 %v1107
    %v1274 = vunpack.c.l.b16 %v1108
    %v1275 = vunpack.c.h.b16 %v1108
    %v1276 = vunpack.c.l.b16 %v1109
    %v1277 = vunpack.c.h.b16 %v1109
    %v1278 = vunpack.c.l.b16 %v1110
    %v1279 = vunpack.c.h.b16 %v1110
    %v1280 = vunpack.c.l.b16 %v1111
    %v1281 = vunpack.c.h.b16 %v1111
    %v1282 = vunpack.c.l.b16 %v1112
    %v1283 = vunpack.c.h.b16 %v1112
    %v1284 = vunpack.c.l.b16 %v1113
    %v1285 = vunpack.c.h.b16 %v1113
    %v1286 = vunpack.c.l.b16 %v1114
    %v1287 = vunpack.c.h.b16 %v1114
    %v1288 = vunpack.c.l.b16 %v1115
    %v1289 = vunpack.c.h.b16 %v1115
    %v1290 = vunpack.c.l.b16 %v1116
    %v1291 = vunpack.c.h.b16 %v1116
    %v1292 = vunpack.c.l.b16 %v1117
    %v1293 = vunpack.c.h.b16 %v1117
    %v1294 = vunpack.c.l.b16 %v1118
    %v1295 = vunpack.c.h.b16 %v1118
    %v1296 = vunpack.c.l.b16 %v1119
    %v1297 = vunpack.c.h.b16 %v1119
    %v1298 = vunpack.c.l.b16 %v1120
    %v1299 = vunpack.c.h.b16 %v1120
    %v1300 = vunpack.c.l.b16 %v1121
    %v1301 = vunpack.c.h.b16 %v1121
    %v1302 = vunpack.c.l.b16 %v1122
    %v1303 = vunpack.c.h.b16 %v1122
    %v1304 = vunpack.c.l.b16 %v1123
    %v1305 = vunpack.c.h.b16 %v1123
    %v1306 = vunpack.c.l.b16 %v1124
    %v1307 = vunpack.c.h.b16 %v1124
    %v1308 = vunpack.c.l.b16 %v1125
    %v1309 = vunpack.c.h.b16 %v1125
    %v1310 = vunpack.c.l.b16 %v1126
    %v1311 = vunpack.c.h.b16 %v1126
    %v1312 = vunpack.c.l.b16 %v1127
    %v1313 = vunpack.c.h.b16 %v1127
    %v1314 = vunpack.c.l.b16 %v1128
    %v1315 = vunpack.c.h.b16 %v1128
    %v1316 = vunpack.c.l.b16 %v1129
    %v1317 = vunpack.c.h.b16 %v1129
    %v1318 = vunpack.c.l.b16 %v1130
    %v1319 = vunpack.c.h.b16 %v1130
    %v1320 = vunpack.c.l.b16 %v1131
    %v1321 = vunpack.c.h.b16 %v1131
    %v1322 = vunpack.c.l.b16 %v1132
    %v1323 = vunpack.c.h.b16 %v1132
    %v1324 = vunpack.c.l.b16 %v1133
    %v1325 = vunpack.c.h.b16 %v1133
    %v1326 = vunpack.c.l.b16 %v1134
    %v1327 = vunpack.c.h.b16 %v1134
    %v1328 = vunpack.c.l.b16 %v1135
    %v1329 = vunpack.c.h.b16 %v1135
    %v1330 = vunpack.c.l.b16 %v1136
    %v1331 = vunpack.c.h.b16 %v1136
    %v1332 = vunpack.c.l.b16 %v1137
    %v1333 = vunpack.c.h.b16 %v1137
    %v1334 = vunpack.c.l.b16 %v1138
    %v1335 = vunpack.c.h.b16 %v1138
    %v1336 = vunpack.c.l.b16 %v1139
    %v1337 = vunpack.c.h.b16 %v1139
    %v1338 = vunpack.c.l.b16 %v1140
    %v1339 = vunpack.c.h.b16 %v1140
    %v1340 = vunpack.c.l.b16 %v1141
    %v1341 = vunpack.c.h.b16 %v1141
    %v1342 = vunpack.c.l.b16 %v1142
    %v1343 = vunpack.c.h.b16 %v1142
    %v1344 = vunpack.c.l.b16 %v1143
    %v1345 = vunpack.c.h.b16 %v1143
    %v1346 = vpack.c.b16 %v1222, %v1218
    %v1347 = vpack.c.b16 %v1223, %v1219
    %v1348 = vpack.c.b16 %v1224, %v1220
    %v1349 = vpack.c.b16 %v1225, %v1221
    %v1350 = vpack.c.b16 %v1230, %v1226
    %v1351 = vpack.c.b16 %v1231, %v1227
    %v1352 = vpack.c.b16 %v1232, %v1228
    %v1353 = vpack.c.b16 %v1233, %v1229
    %v1354 = vpack.c.b16 %v1238, %v1234
    %v1355 = vpack.c.b16 %v1239, %v1235
    %v1356 = vpack.c.b16 %v1240, %v1236
    %v1357 = vpack.c.b16 %v1241, %v1237
    %v1358 = vpack.c.b16 %v1246, %v1242
    %v1359 = vpack.c.b16 %v1247, %v1243
    %v1360 = vpack.c.b16 %v1248, %v1244
    %v1361 = vpack.c.b16 %v1249, %v1245
    %v1362 = vpack.c.b16 %v1254, %v1250
    %v1363 = vpack.c.b16 %v1255, %v1251
    %v1364 = vpack.c.b16 %v1256, %v1252
    %v1365 = vpack.c.b16 %v1257, %v1253
    %v1366 = vpack.c.b16 %v1262, %v1258
    %v1367 = vpack.c.b16 %v1263, %v1259
    %v1368 = vpack.c.b16 %v1264, %v1260
    %v1369 = vpack.c.b16 %v1265, %v1261
    %v1370 = vpack.c.b16 %v1270, %v1266
    %v1371 = vpack.c.b16 %v1271, %v1267
    %v1372 = vpack.c.b16 %v1272, %v1268
    %v1373 = vpack.c.b16 %v1273, %v1269
    %v1374 = vpack.c.b16 %v1278, %v1274
    %v1375 = vpack.c.b16 %v1279, %v1275
    %v1376 = vpack.c.b16 %v1280, %v1276
    %v1377 = vpack.c.b16 %v1281, %v1277
    %v1378 = vpack.c.b16 %v1286, %v1282
    %v1379 = vpack.c.b16 %v1287, %v1283
    %v1380 = vpack.c.b16 %v1288, %v1284
    %v1381 = vpack.c.b16 %v1289, %v1285
    %v1382 = vpack.c.b16 %v1294, %v1290
    %v1383 = vpack.c.b16 %v1295, %v1291
    %v1384 = vpack.c.b16 %v1296, %v1292
    %v1385 = vpack.c.b16 %v1297, %v1293
    %v1386 = vpack.c.b16 %v1302, %v1298
    %v1387 = vpack.c.b16 %v1303, %v1299
    %v1388 = vpack.c.b16 %v1304, %v1300
    %v1389 = vpack.c.b16 %v1305, %v1301
    %v1390 = vpack.c.b16 %v1310, %v1306
    %v1391 = vpack.c.b16 %v1311, %v1307
    %v1392 = vpack.c.b16 %v1312, %v1308
    %v1393 = vpack.c.b16 %v1313, %v1309
    %v1394 = vpack.c.b16 %v1318, %v1314
    %v1395 = vpack.c.b16 %v1319, %v1315
    %v1396 = vpack.c.b16 %v1320, %v1316
    %v1397 = vpack.c.b16 %v1321, %v1317
    %v1398 = vpack.c.b16 %v1326, %v1322
    %v1399 = vpack.c.b16 %v1327, %v1323
    %v1400 = vpack.c.b16 %v1328, %v1324
    %v1401 = vpack.c.b16 %v1329, %v1325
    %v1402 = vpack.c.b16 %v1334, %v1330
    %v1403 = vpack.c.b16 %v1335, %v1331
    %v1404 = vpack.c.b16 %v1336, %v1332
    %v1405 = vpack.c.b16 %v1337, %v1333
    %v1406 = vpack.c.b16 %v1342, %v1338
    %v1407 = vpack.c.b16 %v1343, %v1339
    %v1408 = vpack.c.b16 %v1344, %v1340
    %v1409 = vpack.c.b16 %v1345, %v1341
    %1474 = vmatpush.bf16.msra.mxu0 %v1374
    %1475 = vmatpush.bf16.msra.mxu0 %v1370
    %1476 = vmatpush.bf16.msra.mxu0 %v1366
    %1477 = vmatpush.bf16.msra.mxu0 %v1362
    %1478 = vmatpush.bf16.msra.mxu0 %v1358
    %1479 = vmatpush.bf16.msra.mxu0 %v1354
    %1480 = vmatpush.bf16.msra.mxu0 %v1350
    %1481 = vmatpush.bf16.msra.mxu0 %v1346
    %1482 = vmatmul.bf16.gmra.mxu0 %v1078
    %v1483 = vpop.f32.mrf.mxu0
    %v1484 = vadd.f32 %v1146, %v1483
    %v1485 = vpop.f32.mrf.mxu0
    %1486 = vdwg.mxu0
    %1487 = vmatpush.bf16.msra.mxu0 %v1406
    %1488 = vmatpush.bf16.msra.mxu0 %v1402
    %1489 = vmatpush.bf16.msra.mxu0 %v1398
    %1490 = vmatpush.bf16.msra.mxu0 %v1394
    %1491 = vmatpush.bf16.msra.mxu0 %v1390
    %1492 = vmatpush.bf16.msra.mxu0 %v1386
    %1493 = vmatpush.bf16.msra.mxu0 %v1382
    %1494 = vmatpush.bf16.msra.mxu0 %v1378
    %1495 = vmatmul.bf16.gmra.mxu0 %v1079
    %v1496 = vpop.f32.mrf.mxu0
    %v1497 = vadd.f32 %v1484, %v1496
    %v1498 = vpop.f32.mrf.mxu0
    %1499 = vdwg.mxu0
    %1500 = vmatpush.bf16.msra.mxu0 %v1375
    %1501 = vmatpush.bf16.msra.mxu0 %v1371
    %1502 = vmatpush.bf16.msra.mxu0 %v1367
    %1503 = vmatpush.bf16.msra.mxu0 %v1363
    %1504 = vmatpush.bf16.msra.mxu0 %v1359
    %1505 = vmatpush.bf16.msra.mxu0 %v1355
    %1506 = vmatpush.bf16.msra.mxu0 %v1351
    %1507 = vmatpush.bf16.msra.mxu0 %v1347
    %1508 = vmatmul.bf16.gmra.mxu0 %v1078
    %v1509 = vpop.f32.mrf.mxu0
    %v1510 = vadd.f32 %v1147, %v1509
    %v1511 = vpop.f32.mrf.mxu0
    %1512 = vdwg.mxu0
    %1513 = vmatpush.bf16.msra.mxu0 %v1407
    %1514 = vmatpush.bf16.msra.mxu0 %v1403
    %1515 = vmatpush.bf16.msra.mxu0 %v1399
    %1516 = vmatpush.bf16.msra.mxu0 %v1395
    %1517 = vmatpush.bf16.msra.mxu0 %v1391
    %1518 = vmatpush.bf16.msra.mxu0 %v1387
    %1519 = vmatpush.bf16.msra.mxu0 %v1383
    %1520 = vmatpush.bf16.msra.mxu0 %v1379
    %1521 = vmatmul.bf16.gmra.mxu0 %v1079
    %v1522 = vpop.f32.mrf.mxu0
    %v1523 = vadd.f32 %v1510, %v1522
    %v1524 = vpop.f32.mrf.mxu0
    %1525 = vdwg.mxu0
    %1526 = vmatpush.bf16.msra.mxu0 %v1376
    %1527 = vmatpush.bf16.msra.mxu0 %v1372
    %1528 = vmatpush.bf16.msra.mxu0 %v1368
    %1529 = vmatpush.bf16.msra.mxu0 %v1364
    %1530 = vmatpush.bf16.msra.mxu0 %v1360
    %1531 = vmatpush.bf16.msra.mxu0 %v1356
    %1532 = vmatpush.bf16.msra.mxu0 %v1352
    %1533 = vmatpush.bf16.msra.mxu0 %v1348
    %1534 = vmatmul.bf16.gmra.mxu0 %v1078
    %v1535 = vpop.f32.mrf.mxu0
    %v1536 = vadd.f32 %v1148, %v1535
    %v1537 = vpop.f32.mrf.mxu0
    %1538 = vdwg.mxu0
    %1539 = vmatpush.bf16.msra.mxu0 %v1408
    %1540 = vmatpush.bf16.msra.mxu0 %v1404
    %1541 = vmatpush.bf16.msra.mxu0 %v1400
    %1542 = vmatpush.bf16.msra.mxu0 %v1396
    %1543 = vmatpush.bf16.msra.mxu0 %v1392
    %1544 = vmatpush.bf16.msra.mxu0 %v1388
    %1545 = vmatpush.bf16.msra.mxu0 %v1384
    %1546 = vmatpush.bf16.msra.mxu0 %v1380
    %1547 = vmatmul.bf16.gmra.mxu0 %v1079
    %v1548 = vpop.f32.mrf.mxu0
    %v1549 = vadd.f32 %v1536, %v1548
    %v1550 = vpop.f32.mrf.mxu0
    %1551 = vdwg.mxu0
    %1552 = vmatpush.bf16.msra.mxu0 %v1377
    %1553 = vmatpush.bf16.msra.mxu0 %v1373
    %1554 = vmatpush.bf16.msra.mxu0 %v1369
    %1555 = vmatpush.bf16.msra.mxu0 %v1365
    %1556 = vmatpush.bf16.msra.mxu0 %v1361
    %1557 = vmatpush.bf16.msra.mxu0 %v1357
    %1558 = vmatpush.bf16.msra.mxu0 %v1353
    %1559 = vmatpush.bf16.msra.mxu0 %v1349
    %1560 = vmatmul.bf16.gmra.mxu0 %v1078
    %v1561 = vpop.f32.mrf.mxu0
    %v1562 = vadd.f32 %v1149, %v1561
    %v1563 = vpop.f32.mrf.mxu0
    %1564 = vdwg.mxu0
    %1565 = vmatpush.bf16.msra.mxu0 %v1409
    %1566 = vmatpush.bf16.msra.mxu0 %v1405
    %1567 = vmatpush.bf16.msra.mxu0 %v1401
    %1568 = vmatpush.bf16.msra.mxu0 %v1397
    %1569 = vmatpush.bf16.msra.mxu0 %v1393
    %1570 = vmatpush.bf16.msra.mxu0 %v1389
    %1571 = vmatpush.bf16.msra.mxu0 %v1385
    %1572 = vmatpush.bf16.msra.mxu0 %v1381
    %1573 = vmatmul.bf16.gmra.mxu0 %v1079
    %v1574 = vpop.f32.mrf.mxu0
    %v1575 = vadd.f32 %v1562, %v1574
    %v1576 = vpop.f32.mrf.mxu0
    %1577 = vdwg.mxu0
    %v1578 = vmax.f32 %v1497, 0.0
    %v1579 = vmax.f32 %v1523, 0.0
    %v1580 = vmax.f32 %v1549, 0.0
    %v1581 = vmax.f32 %v1575, 0.0
    %v1582 = vpack.c.bf16 %v1578, %v1578
    %v1583 = vpack.c.bf16 %v1579, %v1579
    %v1584 = vpack.c.bf16 %v1580, %v1580
    %v1585 = vpack.c.bf16 %v1581, %v1581
    %v1586 = vld [vmem:[#allocation7] sm:$0xf]
    %v1587 = vld [vmem:[#allocation7 + $0x4] sm:$0xf]
    %v1588 = vld [vmem:[#allocation7 + $0x8] sm:$0xf]
    %v1589 = vld [vmem:[#allocation7 + $0xc] sm:$0xf]
    %v1590 = vld [vmem:[#allocation7 + $0x10] sm:$0xf]
    %v1591 = vld [vmem:[#allocation7 + $0x14] sm:$0xf]
    %v1592 = vld [vmem:[#allocation7 + $0x18] sm:$0xf]
    %v1593 = vld [vmem:[#allocation7 + $0x1c] sm:$0xf]
    %v1594 = vld [vmem:[#allocation7 + $0x20] sm:$0xf]
    %v1595 = vld [vmem:[#allocation7 + $0x24] sm:$0xf]
    %v1596 = vld [vmem:[#allocation7 + $0x28] sm:$0xf]
    %v1597 = vld [vmem:[#allocation7 + $0x2c] sm:$0xf]
    %v1598 = vld [vmem:[#allocation7 + $0x30] sm:$0xf]
    %v1599 = vld [vmem:[#allocation7 + $0x34] sm:$0xf]
    %v1600 = vld [vmem:[#allocation7 + $0x38] sm:$0xf]
    %v1601 = vld [vmem:[#allocation7 + $0x3c] sm:$0xf]
    %v1602 = vld [vmem:[#allocation7 + $0x40] sm:$0xf]
    %v1603 = vld [vmem:[#allocation7 + $0x44] sm:$0xf]
    %v1604 = vld [vmem:[#allocation7 + $0x48] sm:$0xf]
    %v1605 = vld [vmem:[#allocation7 + $0x4c] sm:$0xf]
    %v1606 = vld [vmem:[#allocation7 + $0x50] sm:$0xf]
    %v1607 = vld [vmem:[#allocation7 + $0x54] sm:$0xf]
    %v1608 = vld [vmem:[#allocation7 + $0x58] sm:$0xf]
    %v1609 = vld [vmem:[#allocation7 + $0x5c] sm:$0xf]
    %v1610 = vld [vmem:[#allocation7 + $0x60] sm:$0xf]
    %v1611 = vld [vmem:[#allocation7 + $0x64] sm:$0xf]
    %v1612 = vld [vmem:[#allocation7 + $0x68] sm:$0xf]
    %v1613 = vld [vmem:[#allocation7 + $0x6c] sm:$0xf]
    %v1614 = vld [vmem:[#allocation7 + $0x70] sm:$0xf]
    %v1615 = vld [vmem:[#allocation7 + $0x74] sm:$0xf]
    %v1616 = vld [vmem:[#allocation7 + $0x78] sm:$0xf]
    %v1617 = vld [vmem:[#allocation7 + $0x7c] sm:$0xf]
    %v1618 = vld [vmem:[#allocation7 + $0x80] sm:$0xf]
    %v1619 = vld [vmem:[#allocation7 + $0x84] sm:$0xf]
    %v1620 = vld [vmem:[#allocation7 + $0x88] sm:$0xf]
    %v1621 = vld [vmem:[#allocation7 + $0x8c] sm:$0xf]
    %v1622 = vld [vmem:[#allocation7 + $0x90] sm:$0xf]
    %v1623 = vld [vmem:[#allocation7 + $0x94] sm:$0xf]
    %v1624 = vld [vmem:[#allocation7 + $0x98] sm:$0xf]
    %v1625 = vld [vmem:[#allocation7 + $0x9c] sm:$0xf]
    %v1626 = vld [vmem:[#allocation7 + $0xa0] sm:$0xf]
    %v1627 = vld [vmem:[#allocation7 + $0xa4] sm:$0xf]
    %v1628 = vld [vmem:[#allocation7 + $0xa8] sm:$0xf]
    %v1629 = vld [vmem:[#allocation7 + $0xac] sm:$0xf]
    %v1630 = vld [vmem:[#allocation7 + $0xb0] sm:$0xf]
    %v1631 = vld [vmem:[#allocation7 + $0xb4] sm:$0xf]
    %v1632 = vld [vmem:[#allocation7 + $0xb8] sm:$0xf]
    %v1633 = vld [vmem:[#allocation7 + $0xbc] sm:$0xf]
    %v1634 = vld [vmem:[#allocation7 + $0xc0] sm:$0xf]
    %v1635 = vld [vmem:[#allocation7 + $0xc4] sm:$0xf]
    %v1636 = vld [vmem:[#allocation7 + $0xc8] sm:$0xf]
    %v1637 = vld [vmem:[#allocation7 + $0xcc] sm:$0xf]
    %v1638 = vld [vmem:[#allocation7 + $0xd0] sm:$0xf]
    %v1639 = vld [vmem:[#allocation7 + $0xd4] sm:$0xf]
    %v1640 = vld [vmem:[#allocation7 + $0xd8] sm:$0xf]
    %v1641 = vld [vmem:[#allocation7 + $0xdc] sm:$0xf]
    %v1642 = vld [vmem:[#allocation7 + $0xe0] sm:$0xf]
    %v1643 = vld [vmem:[#allocation7 + $0xe4] sm:$0xf]
    %v1644 = vld [vmem:[#allocation7 + $0xe8] sm:$0xf]
    %v1645 = vld [vmem:[#allocation7 + $0xec] sm:$0xf]
    %v1646 = vld [vmem:[#allocation7 + $0xf0] sm:$0xf]
    %v1647 = vld [vmem:[#allocation7 + $0xf4] sm:$0xf]
    %v1648 = vld [vmem:[#allocation7 + $0xf8] sm:$0xf]
    %v1649 = vld [vmem:[#allocation7 + $0xfc] sm:$0xf]
    %v1650 = vld [vmem:[%s5] sm:$0x1]
    %v1652 = vperm.slane %v1650, 0
    %v1718 = vunpack.c.l.b16 %v1586
    %v1719 = vunpack.c.l.b16 %v1587
    %v1720 = vunpack.c.l.b16 %v1588
    %v1721 = vunpack.c.l.b16 %v1589
    %v1722 = vunpack.c.l.b16 %v1590
    %v1723 = vunpack.c.l.b16 %v1591
    %v1724 = vunpack.c.l.b16 %v1592
    %v1725 = vunpack.c.l.b16 %v1593
    %v1726 = vunpack.c.l.b16 %v1594
    %v1727 = vunpack.c.l.b16 %v1595
    %v1728 = vunpack.c.l.b16 %v1596
    %v1729 = vunpack.c.l.b16 %v1597
    %v1730 = vunpack.c.l.b16 %v1598
    %v1731 = vunpack.c.l.b16 %v1599
    %v1732 = vunpack.c.l.b16 %v1600
    %v1733 = vunpack.c.l.b16 %v1601
    %v1734 = vunpack.c.l.b16 %v1602
    %v1735 = vunpack.c.l.b16 %v1603
    %v1736 = vunpack.c.l.b16 %v1604
    %v1737 = vunpack.c.l.b16 %v1605
    %v1738 = vunpack.c.l.b16 %v1606
    %v1739 = vunpack.c.l.b16 %v1607
    %v1740 = vunpack.c.l.b16 %v1608
    %v1741 = vunpack.c.l.b16 %v1609
    %v1742 = vunpack.c.l.b16 %v1610
    %v1743 = vunpack.c.l.b16 %v1611
    %v1744 = vunpack.c.l.b16 %v1612
    %v1745 = vunpack.c.l.b16 %v1613
    %v1746 = vunpack.c.l.b16 %v1614
    %v1747 = vunpack.c.l.b16 %v1615
    %v1748 = vunpack.c.l.b16 %v1616
    %v1749 = vunpack.c.l.b16 %v1617
    %v1750 = vunpack.c.l.b16 %v1618
    %v1751 = vunpack.c.l.b16 %v1619
    %v1752 = vunpack.c.l.b16 %v1620
    %v1753 = vunpack.c.l.b16 %v1621
    %v1754 = vunpack.c.l.b16 %v1622
    %v1755 = vunpack.c.l.b16 %v1623
    %v1756 = vunpack.c.l.b16 %v1624
    %v1757 = vunpack.c.l.b16 %v1625
    %v1758 = vunpack.c.l.b16 %v1626
    %v1759 = vunpack.c.l.b16 %v1627
    %v1760 = vunpack.c.l.b16 %v1628
    %v1761 = vunpack.c.l.b16 %v1629
    %v1762 = vunpack.c.l.b16 %v1630
    %v1763 = vunpack.c.l.b16 %v1631
    %v1764 = vunpack.c.l.b16 %v1632
    %v1765 = vunpack.c.l.b16 %v1633
    %v1766 = vunpack.c.l.b16 %v1634
    %v1767 = vunpack.c.l.b16 %v1635
    %v1768 = vunpack.c.l.b16 %v1636
    %v1769 = vunpack.c.l.b16 %v1637
    %v1770 = vunpack.c.l.b16 %v1638
    %v1771 = vunpack.c.l.b16 %v1639
    %v1772 = vunpack.c.l.b16 %v1640
    %v1773 = vunpack.c.l.b16 %v1641
    %v1774 = vunpack.c.l.b16 %v1642
    %v1775 = vunpack.c.l.b16 %v1643
    %v1776 = vunpack.c.l.b16 %v1644
    %v1777 = vunpack.c.l.b16 %v1645
    %v1778 = vunpack.c.l.b16 %v1646
    %v1779 = vunpack.c.l.b16 %v1647
    %v1780 = vunpack.c.l.b16 %v1648
    %v1781 = vunpack.c.l.b16 %v1649
    %v1782 = vpack.c.b16 %v1719, %v1718
    %v1783 = vpack.c.b16 %v1721, %v1720
    %v1784 = vpack.c.b16 %v1723, %v1722
    %v1785 = vpack.c.b16 %v1725, %v1724
    %v1786 = vpack.c.b16 %v1727, %v1726
    %v1787 = vpack.c.b16 %v1729, %v1728
    %v1788 = vpack.c.b16 %v1731, %v1730
    %v1789 = vpack.c.b16 %v1733, %v1732
    %v1790 = vpack.c.b16 %v1735, %v1734
    %v1791 = vpack.c.b16 %v1737, %v1736
    %v1792 = vpack.c.b16 %v1739, %v1738
    %v1793 = vpack.c.b16 %v1741, %v1740
    %v1794 = vpack.c.b16 %v1743, %v1742
    %v1795 = vpack.c.b16 %v1745, %v1744
    %v1796 = vpack.c.b16 %v1747, %v1746
    %v1797 = vpack.c.b16 %v1749, %v1748
    %v1798 = vpack.c.b16 %v1751, %v1750
    %v1799 = vpack.c.b16 %v1753, %v1752
    %v1800 = vpack.c.b16 %v1755, %v1754
    %v1801 = vpack.c.b16 %v1757, %v1756
    %v1802 = vpack.c.b16 %v1759, %v1758
    %v1803 = vpack.c.b16 %v1761, %v1760
    %v1804 = vpack.c.b16 %v1763, %v1762
    %v1805 = vpack.c.b16 %v1765, %v1764
    %v1806 = vpack.c.b16 %v1767, %v1766
    %v1807 = vpack.c.b16 %v1769, %v1768
    %v1808 = vpack.c.b16 %v1771, %v1770
    %v1809 = vpack.c.b16 %v1773, %v1772
    %v1810 = vpack.c.b16 %v1775, %v1774
    %v1811 = vpack.c.b16 %v1777, %v1776
    %v1812 = vpack.c.b16 %v1779, %v1778
    %v1813 = vpack.c.b16 %v1781, %v1780
    %1846 = vmatpush.bf16.msra.mxu0 %v1789
    %1847 = vmatpush.bf16.msra.mxu0 %v1788
    %1848 = vmatpush.bf16.msra.mxu0 %v1787
    %1849 = vmatpush.bf16.msra.mxu0 %v1786
    %1850 = vmatpush.bf16.msra.mxu0 %v1785
    %1851 = vmatpush.bf16.msra.mxu0 %v1784
    %1852 = vmatpush.bf16.msra.mxu0 %v1783
    %1853 = vmatpush.bf16.msra.mxu0 %v1782
    %1854 = vmatmul.bf16.gmra.mxu0 %v1582
    %v1855 = vpop.f32.mrf.mxu0
    %v1856 = vadd.f32 %v1652, %v1855
    %v1857 = vpop.f32.mrf.mxu0
    %1858 = vdwg.mxu0
    %1859 = vmatpush.bf16.msra.mxu0 %v1797
    %1860 = vmatpush.bf16.msra.mxu0 %v1796
    %1861 = vmatpush.bf16.msra.mxu0 %v1795
    %1862 = vmatpush.bf16.msra.mxu0 %v1794
    %1863 = vmatpush.bf16.msra.mxu0 %v1793
    %1864 = vmatpush.bf16.msra.mxu0 %v1792
    %1865 = vmatpush.bf16.msra.mxu0 %v1791
    %1866 = vmatpush.bf16.msra.mxu0 %v1790
    %1867 = vmatmul.bf16.gmra.mxu0 %v1583
    %v1868 = vpop.f32.mrf.mxu0
    %v1869 = vadd.f32 %v1856, %v1868
    %v1870 = vpop.f32.mrf.mxu0
    %1871 = vdwg.mxu0
    %1872 = vmatpush.bf16.msra.mxu0 %v1805
    %1873 = vmatpush.bf16.msra.mxu0 %v1804
    %1874 = vmatpush.bf16.msra.mxu0 %v1803
    %1875 = vmatpush.bf16.msra.mxu0 %v1802
    %1876 = vmatpush.bf16.msra.mxu0 %v1801
    %1877 = vmatpush.bf16.msra.mxu0 %v1800
    %1878 = vmatpush.bf16.msra.mxu0 %v1799
    %1879 = vmatpush.bf16.msra.mxu0 %v1798
    %1880 = vmatmul.bf16.gmra.mxu0 %v1584
    %v1881 = vpop.f32.mrf.mxu0
    %v1882 = vadd.f32 %v1869, %v1881
    %v1883 = vpop.f32.mrf.mxu0
    %1884 = vdwg.mxu0
    %1885 = vmatpush.bf16.msra.mxu0 %v1813
    %1886 = vmatpush.bf16.msra.mxu0 %v1812
    %1887 = vmatpush.bf16.msra.mxu0 %v1811
    %1888 = vmatpush.bf16.msra.mxu0 %v1810
    %1889 = vmatpush.bf16.msra.mxu0 %v1809
    %1890 = vmatpush.bf16.msra.mxu0 %v1808
    %1891 = vmatpush.bf16.msra.mxu0 %v1807
    %1892 = vmatpush.bf16.msra.mxu0 %v1806
    %1893 = vmatmul.bf16.gmra.mxu0 %v1585
    %v1894 = vpop.f32.mrf.mxu0
    %v1895 = vadd.f32 %v1882, %v1894
    %v1896 = vpop.f32.mrf.mxu0
    %1897 = vdwg.mxu0
    %1898 = vst [vmem:[#allocation8] sm:$0x3] %v1895
    // Predicated region
    $region38: #{tiny_model_forward.1} parent=1 // pred_check
      _
    $region39: #{tiny_model_forward.1} parent=1 // pred_check_branch
      %1900 = sbr.rel (0) target = $region41
    $region40: #{tiny_model_forward.1} parent=1 // pred_region
      %1902 = vsyncadd [#allocation4], 0
      %s1904 = sshll.u32 [#allocation8], 4
      %s1905 = int_to_ptr.vmem [resolvable:$true] %s1904
      %s1906 = sshll.u32 %s6, 4
      %s1907 = int_to_ptr.hbm [resolvable:$true] %s1906
      %1909 = dma.vmem_to_hbm [thread:$0]  %s1905, 32, %s1907, [#allocation4]
    $region41: #{tiny_model_forward.1} parent=1 // pred_fallthru
      _
    // Predicated region
    $region42: #{tiny_model_forward.1} parent=1 // pred_check
      _
    $region43: #{tiny_model_forward.1} parent=1 // pred_check_branch
      %1911 = sbr.rel (0) target = $region45
    $region44: #{tiny_model_forward.1} parent=1 // pred_region
      %1913 = dma.done [#allocation4], 32
    $region45: #{tiny_model_forward.1} parent=1 // pred_fallthru
      _
    %1914 = vsyncpa [#allocation3], 1
    %1915 = vsyncpa [#allocation6], 1
    %1916 = vsyncpa [#allocation4], 1

</llo_original>
